<compile_context>
chip_gen: v6e
topology: v6e:2x2x1
jax: 0.10.0
libtpu: 0.0.40
codegen_flags: <defaults>
</compile_context>

<pallas_src>
import jax
import jax.numpy as jnp
from jax.experimental import pallas as pl
from jax.experimental.pallas import tpu as pltpu


def spiralnet_kernel(x_ref, w1_ref, b1_ref, w2_ref, b2_ref, w3_ref, b3_ref, o_ref):
    # x: (tile_b, F); weights (in, out); biases (1, out).  Three fused layers,
    # all plain non-transposed matmuls with f32 accumulation on the MXU.
    x = x_ref[...]                                                       # (tb, F)
    h1 = jnp.dot(x, w1_ref[...], preferred_element_type=jnp.float32)    # (tb, H)
    h1 = jnp.maximum(h1 + b1_ref[...], 0.0)
    h2 = jnp.dot(h1, w2_ref[...], preferred_element_type=jnp.float32)   # (tb, H)
    h2 = jnp.maximum(h2 + b2_ref[...], 0.0)
    out = jnp.dot(h2, w3_ref[...], preferred_element_type=jnp.float32)  # (tb, OUT)
    o_ref[...] = (out + b3_ref[...]).astype(o_ref.dtype)


def _tensorcores_per_chip():
    """Best-effort TensorCore count per chip (2 on v7x, else 1).

    Only used to pick the tile size (so each core gets exactly one step);
    any value yields a correct kernel.
    """
    try:
        dev = jax.devices()[0]
        kind = str(getattr(dev, "device_kind", "")).lower()
        if "v7" in kind:
            return 2
    except Exception:
        pass
    return 1


def _round_up(x, m):
    return ((x + m - 1) // m) * m


def spiralnet_forward(x, params, *, tile_b=None, max_tile_b=2048):
    """x: [B, input_features] float32.  params: w* are (in, out), b* are (1, out)."""
    B, F = x.shape
    H = params["w1"].shape[1]
    OUT = params["w3"].shape[1]

    if tile_b is None:
        # Minimum-step grid: 1 step on single-TC chips, 2 on v7x.
        tile_b = pl.cdiv(B, _tensorcores_per_chip())
    # Sublane-aligned (batch lives on the sublane axis); soft VMEM-safety cap.
    tile_b = max(8, min(_round_up(int(tile_b), 8), _round_up(int(max_tile_b), 8)))
    grid_len = pl.cdiv(B, tile_b)

    full = lambda shape: pl.BlockSpec(shape, lambda i: (0, 0))

    return pl.pallas_call(
        spiralnet_kernel,
        out_shape=jax.ShapeDtypeStruct((B, OUT), jnp.float32),
        grid_spec=pl.GridSpec(
            grid=(grid_len,),
            in_specs=[
                pl.BlockSpec((tile_b, F), lambda i: (i, 0)),  # x tile (ragged tail masked)
                full((F, H)),      # w1 (in, out)
                full((1, H)),      # b1
                full((H, H)),      # w2
                full((1, H)),      # b2
                full((H, OUT)),    # w3
                full((1, OUT)),    # b3
            ],
            out_specs=pl.BlockSpec((tile_b, OUT), lambda i: (i, 0)),
        ),
        compiler_params=pltpu.CompilerParams(
            dimension_semantics=("parallel",),
        ),
    )(x, params["w1"], params["b1"], params["w2"], params["b2"],
      params["w3"], params["b3"])


def init_params(key, input_features, output_features, hidden_units):
    """nn.Linear-style init (U(-1/sqrt(fan_in), 1/sqrt(fan_in))); weights stored
    pre-transposed as (in, out) and biases as (1, out) so no transposes are
    needed anywhere at forward time."""
    ks = jax.random.split(key, 6)

    def linear(kw, kb, fan_in, fan_out):
        bound = 1.0 / jnp.sqrt(jnp.float32(fan_in))
        w = jax.random.uniform(kw, (fan_in, fan_out), jnp.float32, -bound, bound)
        b = jax.random.uniform(kb, (1, fan_out), jnp.float32, -bound, bound)
        return w, b

    w1, b1 = linear(ks[0], ks[1], input_features, hidden_units)
    w2, b2 = linear(ks[2], ks[3], hidden_units, hidden_units)
    w3, b3 = linear(ks[4], ks[5], hidden_units, output_features)
    return dict(w1=w1, b1=b1, w2=w2, b2=b2, w3=w3, b3=b3)


def reference_forward(x, p):
    h1 = jnp.maximum(x @ p["w1"] + p["b1"], 0.0)
    h2 = jnp.maximum(h1 @ p["w2"] + p["b2"], 0.0)
    return h2 @ p["w3"] + p["b3"]


if __name__ == "__main__":
    key = jax.random.PRNGKey(0)
    k_x, k_p, k_x2 = jax.random.split(key, 3)

    input_features = 2    # spiral dataset: 2-D points
    output_features = 3   # 3 spiral arms / classes
    hidden_units = 8      # module default

    params = init_params(k_p, input_features, output_features, hidden_units)

    # Demo batch: grid collapses to 1 step (2 on v7x), no wrapper-side XLA ops.
    batch = 512
    x = jax.random.normal(k_x, (batch, input_features), jnp.float32)
    out = jax.block_until_ready(spiralnet_forward(x, params))
    ref = reference_forward(x, params)
    assert out.shape == (batch, output_features)
    assert jnp.allclose(out, ref, atol=1e-5, rtol=1e-5), "mismatch vs reference"

    # Ragged batch: exercises the masked partial-block path (no host-side pad).
    batch2 = 37
    x2 = jax.random.normal(k_x2, (batch2, input_features), jnp.float32)
    out2 = jax.block_until_ready(spiralnet_forward(x2, params))
    ref2 = reference_forward(x2, params)
    assert out2.shape == (batch2, output_features)
    assert jnp.allclose(out2, ref2, atol=1e-5, rtol=1e-5), "mismatch vs reference (ragged)"

    print("KERNEL_OK")
</pallas_src>

<mosaic_0001>
module attributes {stable_mosaic.version = 11 : i64} {
  func.func @spiralnet_kernel(%arg0: i32, %arg1: memref<512x2xf32, #tpu.memory_space<vmem>>, %arg2: memref<2x8xf32, #tpu.memory_space<vmem>>, %arg3: memref<1x8xf32, #tpu.memory_space<vmem>>, %arg4: memref<8x8xf32, #tpu.memory_space<vmem>>, %arg5: memref<1x8xf32, #tpu.memory_space<vmem>>, %arg6: memref<8x3xf32, #tpu.memory_space<vmem>>, %arg7: memref<1x3xf32, #tpu.memory_space<vmem>>, %arg8: memref<512x3xf32, #tpu.memory_space<vmem>>) attributes {dimension_semantics = [#tpu.dimension_semantics<parallel>], iteration_bounds = array<i64: 1>, scalar_prefetch = 0 : i64, scratch_operands = 0 : i64, tpu.core_type = #tpu.core_type<tc>, window_params = [{transform_indices = @transform_0, window_bounds = array<i64: 512, 2>}, {pipeline_mode = #tpu.pipeline_mode<synchronous>, transform_indices = @transform_1, window_bounds = array<i64: 2, 8>}, {pipeline_mode = #tpu.pipeline_mode<synchronous>, transform_indices = @transform_2, window_bounds = array<i64: 1, 8>}, {pipeline_mode = #tpu.pipeline_mode<synchronous>, transform_indices = @transform_3, window_bounds = array<i64: 8, 8>}, {pipeline_mode = #tpu.pipeline_mode<synchronous>, transform_indices = @transform_4, window_bounds = array<i64: 1, 8>}, {pipeline_mode = #tpu.pipeline_mode<synchronous>, transform_indices = @transform_5, window_bounds = array<i64: 8, 3>}, {pipeline_mode = #tpu.pipeline_mode<synchronous>, transform_indices = @transform_6, window_bounds = array<i64: 1, 3>}, {transform_indices = @transform_7, window_bounds = array<i64: 512, 3>}]} {
    %c0 = arith.constant 0 : index
    %c0_0 = arith.constant 0 : index
    %0 = vector.load %arg1[%c0, %c0_0] : memref<512x2xf32, #tpu.memory_space<vmem>>, vector<512x2xf32>
    %c0_1 = arith.constant 0 : index
    %c0_2 = arith.constant 0 : index
    %1 = vector.load %arg2[%c0_1, %c0_2] : memref<2x8xf32, #tpu.memory_space<vmem>>, vector<2x8xf32>
    %cst = arith.constant dense<0.000000e+00> : vector<512x8xf32>
    %2 = tpu.matmul %0, %1, %cst {dimension_numbers = #tpu.dot_dimension_numbers<[1], [0], [0], [1], [0, 0, 1, 1], [], []>} : vector<512x2xf32>, vector<2x8xf32>, vector<512x8xf32> -> vector<512x8xf32>
    %c0_3 = arith.constant 0 : index
    %c0_4 = arith.constant 0 : index
    %3 = vector.load %arg3[%c0_3, %c0_4] : memref<1x8xf32, #tpu.memory_space<vmem>>, vector<1x8xf32>
    %4 = vector.broadcast %3 : vector<1x8xf32> to vector<512x8xf32>
    %5 = arith.addf %2, %4 : vector<512x8xf32>
    %cst_5 = arith.constant 0.000000e+00 : f32
    %6 = vector.broadcast %cst_5 : f32 to vector<512x8xf32>
    %7 = arith.maximumf %5, %6 : vector<512x8xf32>
    %c0_6 = arith.constant 0 : index
    %c0_7 = arith.constant 0 : index
    %8 = vector.load %arg4[%c0_6, %c0_7] : memref<8x8xf32, #tpu.memory_space<vmem>>, vector<8x8xf32>
    %cst_8 = arith.constant dense<0.000000e+00> : vector<512x8xf32>
    %9 = tpu.matmul %7, %8, %cst_8 {dimension_numbers = #tpu.dot_dimension_numbers<[1], [0], [0], [1], [0, 0, 1, 1], [], []>} : vector<512x8xf32>, vector<8x8xf32>, vector<512x8xf32> -> vector<512x8xf32>
    %c0_9 = arith.constant 0 : index
    %c0_10 = arith.constant 0 : index
    %10 = vector.load %arg5[%c0_9, %c0_10] : memref<1x8xf32, #tpu.memory_space<vmem>>, vector<1x8xf32>
    %11 = vector.broadcast %10 : vector<1x8xf32> to vector<512x8xf32>
    %12 = arith.addf %9, %11 : vector<512x8xf32>
    %cst_11 = arith.constant 0.000000e+00 : f32
    %13 = vector.broadcast %cst_11 : f32 to vector<512x8xf32>
    %14 = arith.maximumf %12, %13 : vector<512x8xf32>
    %c0_12 = arith.constant 0 : index
    %c0_13 = arith.constant 0 : index
    %15 = vector.load %arg6[%c0_12, %c0_13] : memref<8x3xf32, #tpu.memory_space<vmem>>, vector<8x3xf32>
    %cst_14 = arith.constant dense<0.000000e+00> : vector<512x3xf32>
    %16 = tpu.matmul %14, %15, %cst_14 {dimension_numbers = #tpu.dot_dimension_numbers<[1], [0], [0], [1], [0, 0, 1, 1], [], []>} : vector<512x8xf32>, vector<8x3xf32>, vector<512x3xf32> -> vector<512x3xf32>
    %c0_15 = arith.constant 0 : index
    %c0_16 = arith.constant 0 : index
    %17 = vector.load %arg7[%c0_15, %c0_16] : memref<1x3xf32, #tpu.memory_space<vmem>>, vector<1x3xf32>
    %18 = vector.broadcast %17 : vector<1x3xf32> to vector<512x3xf32>
    %19 = arith.addf %16, %18 : vector<512x3xf32>
    %c0_17 = arith.constant 0 : index
    %c0_18 = arith.constant 0 : index
    %20 = vector.load %arg8[%c0_17, %c0_18] : memref<512x3xf32, #tpu.memory_space<vmem>>, vector<512x3xf32>
    tpu.vector_store %arg8[%c0_17, %c0_18], %19 {strides = array<i32>} : memref<512x3xf32, #tpu.memory_space<vmem>>, vector<512x3xf32>,
    return
  }
  func.func @transform_0(%arg0: i32) -> (i32, i32) {
    %c0_i32 = arith.constant 0 : i32
    %c0_i32_0 = arith.constant 0 : i32
    return %arg0, %c0_i32 : i32, i32
  }
  func.func @transform_1(%arg0: i32) -> (i32, i32) {
    %c0_i32 = arith.constant 0 : i32
    %c0_i32_0 = arith.constant 0 : i32
    %c0_i32_1 = arith.constant 0 : i32
    return %c0_i32, %c0_i32_0 : i32, i32
  }
  func.func @transform_2(%arg0: i32) -> (i32, i32) {
    %c0_i32 = arith.constant 0 : i32
    %c0_i32_0 = arith.constant 0 : i32
    %c0_i32_1 = arith.constant 0 : i32
    return %c0_i32, %c0_i32_0 : i32, i32
  }
  func.func @transform_3(%arg0: i32) -> (i32, i32) {
    %c0_i32 = arith.constant 0 : i32
    %c0_i32_0 = arith.constant 0 : i32
    %c0_i32_1 = arith.constant 0 : i32
    return %c0_i32, %c0_i32_0 : i32, i32
  }
  func.func @transform_4(%arg0: i32) -> (i32, i32) {
    %c0_i32 = arith.constant 0 : i32
    %c0_i32_0 = arith.constant 0 : i32
    %c0_i32_1 = arith.constant 0 : i32
    return %c0_i32, %c0_i32_0 : i32, i32
  }
  func.func @transform_5(%arg0: i32) -> (i32, i32) {
    %c0_i32 = arith.constant 0 : i32
    %c0_i32_0 = arith.constant 0 : i32
    %c0_i32_1 = arith.constant 0 : i32
    return %c0_i32, %c0_i32_0 : i32, i32
  }
  func.func @transform_6(%arg0: i32) -> (i32, i32) {
    %c0_i32 = arith.constant 0 : i32
    %c0_i32_0 = arith.constant 0 : i32
    %c0_i32_1 = arith.constant 0 : i32
    return %c0_i32, %c0_i32_0 : i32, i32
  }
  func.func @transform_7(%arg0: i32) -> (i32, i32) {
    %c0_i32 = arith.constant 0 : i32
    %c0_i32_0 = arith.constant 0 : i32
    return %arg0, %c0_i32 : i32, i32
  }
}

</mosaic_0001>

<llo_original>
// kernel: tpu_custom_call.1
$region0: #{tpu_custom_call.1}
  #allocation0 [shape = 'u32[]', space=smem, size = 0x4, offset = 0x4, fixed_abs, tag = 'smem constant byte address 0x4 - core index']
  #allocation1 [shape = 'u32[144,128]{1,0:T(1,128)}', space=vmem, size = 0x12000, scoped, tag = 'internal scratch']
  %s0 = inlined_call_operand.vmem [shape: f32[512,2], index: 0, kind: input, shape index: {}]
  %s1 = inlined_call_operand.vmem [shape: f32[2,8], index: 1, kind: input, shape index: {}]
  %s2 = inlined_call_operand.vmem [shape: f32[1,8], index: 2, kind: input, shape index: {}]
  %s3 = inlined_call_operand.vmem [shape: f32[8,8], index: 3, kind: input, shape index: {}]
  %s4 = inlined_call_operand.vmem [shape: f32[1,8], index: 4, kind: input, shape index: {}]
  %s5 = inlined_call_operand.vmem [shape: f32[8,3], index: 5, kind: input, shape index: {}]
  %s6 = inlined_call_operand.vmem [shape: f32[1,3], index: 6, kind: input, shape index: {}]
  %s7 = inlined_call_operand.vmem [shape: f32[512,3], index: 7, kind: output, shape index: {}]
  %s8 = sld [smem:[#allocation0]]
  $region38: #{tpu_custom_call.1} parent=0
    _
  %s10 = ssub.s32 1, %s8
  %s11 = scalar_select 0, %s10, %s8
  // Predicated region
  $region2: #{tpu_custom_call.1} parent=0 // pred_check
    _
  $region3: #{tpu_custom_call.1} parent=0 // pred_check_branch
    %13 = sbr.rel (0) target = $region5
  $region4: #{tpu_custom_call.1} parent=0 // pred_region
    _
  $region5: #{tpu_custom_call.1} parent=0 // pred_fallthru
    _
  // Predicated region
  $region6: #{tpu_custom_call.1} parent=0 // pred_check
    _
  $region7: #{tpu_custom_call.1} parent=0 // pred_check_branch
    %15 = sbr.rel (0) target = $region9
  $region8: #{tpu_custom_call.1} parent=0 // pred_region
    _
  $region9: #{tpu_custom_call.1} parent=0 // pred_fallthru
    _
  // Predicated region
  $region10: #{tpu_custom_call.1} parent=0 // pred_check
    _
  $region11: #{tpu_custom_call.1} parent=0 // pred_check_branch
    %17 = sbr.rel (0) target = $region13
  $region12: #{tpu_custom_call.1} parent=0 // pred_region
    _
  $region13: #{tpu_custom_call.1} parent=0 // pred_fallthru
    _
  // Predicated region
  $region14: #{tpu_custom_call.1} parent=0 // pred_check
    _
  $region15: #{tpu_custom_call.1} parent=0 // pred_check_branch
    %19 = sbr.rel (0) target = $region17
  $region16: #{tpu_custom_call.1} parent=0 // pred_region
    _
  $region17: #{tpu_custom_call.1} parent=0 // pred_fallthru
    _
  // Predicated region
  $region18: #{tpu_custom_call.1} parent=0 // pred_check
    _
  $region19: #{tpu_custom_call.1} parent=0 // pred_check_branch
    %21 = sbr.rel (0) target = $region21
  $region20: #{tpu_custom_call.1} parent=0 // pred_region
    _
  $region21: #{tpu_custom_call.1} parent=0 // pred_fallthru
    _
  // Predicated region
  $region22: #{tpu_custom_call.1} parent=0 // pred_check
    _
  $region23: #{tpu_custom_call.1} parent=0 // pred_check_branch
    %23 = sbr.rel (0) target = $region25
  $region24: #{tpu_custom_call.1} parent=0 // pred_region
    _
  $region25: #{tpu_custom_call.1} parent=0 // pred_fallthru
    _
  // Predicated region
  $region26: #{tpu_custom_call.1} parent=0 // pred_check
    _
  $region27: #{tpu_custom_call.1} parent=0 // pred_check_branch
    %25 = sbr.rel (0) target = $region29
  $region28: #{tpu_custom_call.1} parent=0 // pred_region
    _
  $region29: #{tpu_custom_call.1} parent=0 // pred_fallthru
    _
  %v26 = vld [vmem:[%s0] sm:$0xff]
  %v27 = vld [vmem:[%s0 + $0x8] sm:$0xff]
  %v28 = vld [vmem:[%s0 + $0x10] sm:$0xff]
  %v29 = vld [vmem:[%s0 + $0x18] sm:$0xff]
  %v30 = vld [vmem:[%s0 + $0x20] sm:$0xff]
  %v31 = vld [vmem:[%s0 + $0x28] sm:$0xff]
  %v32 = vld [vmem:[%s0 + $0x30] sm:$0xff]
  %v33 = vld [vmem:[%s0 + $0x38] sm:$0xff]
  %v34 = vld [vmem:[%s0 + $0x40] sm:$0xff]
  %v35 = vld [vmem:[%s0 + $0x48] sm:$0xff]
  %v36 = vld [vmem:[%s0 + $0x50] sm:$0xff]
  %v37 = vld [vmem:[%s0 + $0x58] sm:$0xff]
  %v38 = vld [vmem:[%s0 + $0x60] sm:$0xff]
  %v39 = vld [vmem:[%s0 + $0x68] sm:$0xff]
  %v40 = vld [vmem:[%s0 + $0x70] sm:$0xff]
  %v41 = vld [vmem:[%s0 + $0x78] sm:$0xff]
  %v42 = vld [vmem:[%s0 + $0x80] sm:$0xff]
  %v43 = vld [vmem:[%s0 + $0x88] sm:$0xff]
  %v44 = vld [vmem:[%s0 + $0x90] sm:$0xff]
  %v45 = vld [vmem:[%s0 + $0x98] sm:$0xff]
  %v46 = vld [vmem:[%s0 + $0xa0] sm:$0xff]
  %v47 = vld [vmem:[%s0 + $0xa8] sm:$0xff]
  %v48 = vld [vmem:[%s0 + $0xb0] sm:$0xff]
  %v49 = vld [vmem:[%s0 + $0xb8] sm:$0xff]
  %v50 = vld [vmem:[%s0 + $0xc0] sm:$0xff]
  %v51 = vld [vmem:[%s0 + $0xc8] sm:$0xff]
  %v52 = vld [vmem:[%s0 + $0xd0] sm:$0xff]
  %v53 = vld [vmem:[%s0 + $0xd8] sm:$0xff]
  %v54 = vld [vmem:[%s0 + $0xe0] sm:$0xff]
  %v55 = vld [vmem:[%s0 + $0xe8] sm:$0xff]
  %v56 = vld [vmem:[%s0 + $0xf0] sm:$0xff]
  %v57 = vld [vmem:[%s0 + $0xf8] sm:$0xff]
  %v58 = vld [vmem:[%s0 + $0x100] sm:$0xff]
  %v59 = vld [vmem:[%s0 + $0x108] sm:$0xff]
  %v60 = vld [vmem:[%s0 + $0x110] sm:$0xff]
  %v61 = vld [vmem:[%s0 + $0x118] sm:$0xff]
  %v62 = vld [vmem:[%s0 + $0x120] sm:$0xff]
  %v63 = vld [vmem:[%s0 + $0x128] sm:$0xff]
  %v64 = vld [vmem:[%s0 + $0x130] sm:$0xff]
  %v65 = vld [vmem:[%s0 + $0x138] sm:$0xff]
  %v66 = vld [vmem:[%s0 + $0x140] sm:$0xff]
  %v67 = vld [vmem:[%s0 + $0x148] sm:$0xff]
  %v68 = vld [vmem:[%s0 + $0x150] sm:$0xff]
  %v69 = vld [vmem:[%s0 + $0x158] sm:$0xff]
  %v70 = vld [vmem:[%s0 + $0x160] sm:$0xff]
  %v71 = vld [vmem:[%s0 + $0x168] sm:$0xff]
  %v72 = vld [vmem:[%s0 + $0x170] sm:$0xff]
  %v73 = vld [vmem:[%s0 + $0x178] sm:$0xff]
  %v74 = vld [vmem:[%s0 + $0x180] sm:$0xff]
  %v75 = vld [vmem:[%s0 + $0x188] sm:$0xff]
  %v76 = vld [vmem:[%s0 + $0x190] sm:$0xff]
  %v77 = vld [vmem:[%s0 + $0x198] sm:$0xff]
  %v78 = vld [vmem:[%s0 + $0x1a0] sm:$0xff]
  %v79 = vld [vmem:[%s0 + $0x1a8] sm:$0xff]
  %v80 = vld [vmem:[%s0 + $0x1b0] sm:$0xff]
  %v81 = vld [vmem:[%s0 + $0x1b8] sm:$0xff]
  %v82 = vld [vmem:[%s0 + $0x1c0] sm:$0xff]
  %v83 = vld [vmem:[%s0 + $0x1c8] sm:$0xff]
  %v84 = vld [vmem:[%s0 + $0x1d0] sm:$0xff]
  %v85 = vld [vmem:[%s0 + $0x1d8] sm:$0xff]
  %v86 = vld [vmem:[%s0 + $0x1e0] sm:$0xff]
  %v87 = vld [vmem:[%s0 + $0x1e8] sm:$0xff]
  %v88 = vld [vmem:[%s0 + $0x1f0] sm:$0xff]
  %v89 = vld [vmem:[%s0 + $0x1f8] sm:$0xff]
  %v90 = vld [vmem:[%s1] sm:$0x3]
  %v91 = vld [vmem:[%s2] sm:$0x1]
  %v93 = vlaneseq
  %v94 = vshrl.u32 %v93, 7
  %v95 = vsub.s32 0, %v94
  %v96 = vrot.slane %v91, %v95
  %vm98 = vcmask 15360
  %v100 = vsel %vm98, %v26, 0
  %v103 = vsel %vm98, %v27, 0
  %v106 = vsel %vm98, %v28, 0
  %v109 = vsel %vm98, %v29, 0
  %v112 = vsel %vm98, %v30, 0
  %v115 = vsel %vm98, %v31, 0
  %v118 = vsel %vm98, %v32, 0
  %v121 = vsel %vm98, %v33, 0
  %v124 = vsel %vm98, %v34, 0
  %v127 = vsel %vm98, %v35, 0
  %v130 = vsel %vm98, %v36, 0
  %v133 = vsel %vm98, %v37, 0
  %v136 = vsel %vm98, %v38, 0
  %v139 = vsel %vm98, %v39, 0
  %v142 = vsel %vm98, %v40, 0
  %v145 = vsel %vm98, %v41, 0
  %v148 = vsel %vm98, %v42, 0
  %v151 = vsel %vm98, %v43, 0
  %v154 = vsel %vm98, %v44, 0
  %v157 = vsel %vm98, %v45, 0
  %v160 = vsel %vm98, %v46, 0
  %v163 = vsel %vm98, %v47, 0
  %v166 = vsel %vm98, %v48, 0
  %v169 = vsel %vm98, %v49, 0
  %v172 = vsel %vm98, %v50, 0
  %v175 = vsel %vm98, %v51, 0
  %v178 = vsel %vm98, %v52, 0
  %v181 = vsel %vm98, %v53, 0
  %v184 = vsel %vm98, %v54, 0
  %v187 = vsel %vm98, %v55, 0
  %v190 = vsel %vm98, %v56, 0
  %v193 = vsel %vm98, %v57, 0
  %v196 = vsel %vm98, %v58, 0
  %v199 = vsel %vm98, %v59, 0
  %v202 = vsel %vm98, %v60, 0
  %v205 = vsel %vm98, %v61, 0
  %v208 = vsel %vm98, %v62, 0
  %v211 = vsel %vm98, %v63, 0
  %v214 = vsel %vm98, %v64, 0
  %v217 = vsel %vm98, %v65, 0
  %v220 = vsel %vm98, %v66, 0
  %v223 = vsel %vm98, %v67, 0
  %v226 = vsel %vm98, %v68, 0
  %v229 = vsel %vm98, %v69, 0
  %v232 = vsel %vm98, %v70, 0
  %v235 = vsel %vm98, %v71, 0
  %v238 = vsel %vm98, %v72, 0
  %v241 = vsel %vm98, %v73, 0
  %v244 = vsel %vm98, %v74, 0
  %v247 = vsel %vm98, %v75, 0
  %v250 = vsel %vm98, %v76, 0
  %v253 = vsel %vm98, %v77, 0
  %v256 = vsel %vm98, %v78, 0
  %v259 = vsel %vm98, %v79, 0
  %v262 = vsel %vm98, %v80, 0
  %v265 = vsel %vm98, %v81, 0
  %v268 = vsel %vm98, %v82, 0
  %v271 = vsel %vm98, %v83, 0
  %v274 = vsel %vm98, %v84, 0
  %v277 = vsel %vm98, %v85, 0
  %v280 = vsel %vm98, %v86, 0
  %v283 = vsel %vm98, %v87, 0
  %v286 = vsel %vm98, %v88, 0
  %v289 = vsel %vm98, %v89, 0
  %vm291 = vcmask 1041408
  %v293 = vsel %vm291, %v90, 0
  %295 = vmatprep.subr.mxu0 0.0
  %296 = vmatpush1.msra.mxu0 0.0
  %297 = vmatprep.subr.mxu0 0.0
  %298 = vmatpush1.msra.mxu0 0.0
  %299 = vmatprep.subr.mxu0 0.0
  %300 = vmatpush1.msra.mxu0 0.0
  %301 = vmatprep.subr.mxu0 0.0
  %302 = vmatpush1.msra.mxu0 0.0
  %303 = vmatprep.subr.mxu0 0.0
  %304 = vmatpush1.msra.mxu0 0.0
  %305 = vmatprep.subr.mxu0 0.0
  %306 = vmatpush1.msra.mxu0 0.0
  %307 = vmatprep.subr.mxu0 0.0
  %308 = vmatpush1.msra.mxu0 0.0
  %309 = vmatprep.subr.mxu0 0.0
  %310 = vmatpush1.msra.mxu0 0.0
  %311 = vmatprep.subr.mxu0 0.0
  %312 = vmatpush1.msra.mxu0 0.0
  %313 = vmatprep.subr.mxu0 0.0
  %314 = vmatpush1.msra.mxu0 0.0
  %315 = vmatprep.subr.mxu0 0.0
  %316 = vmatpush1.msra.mxu0 0.0
  %317 = vmatprep.subr.mxu0 0.0
  %318 = vmatpush1.msra.mxu0 0.0
  %319 = vmatprep.subr.mxu0 0.0
  %320 = vmatpush1.msra.mxu0 0.0
  %321 = vmatprep.subr.mxu0 0.0
  %322 = vmatpush1.msra.mxu0 0.0
  %323 = vmatprep.subr.mxu0 0.0
  %324 = vmatpush1.msra.mxu0 0.0
  %325 = vmatprep.subr.mxu0 0.0
  %326 = vmatpush1.msra.mxu0 %v293
  %327 = vmatprep.subr.mxu0 0.0
  %328 = vmatpush2.msra.mxu0 0.0
  %329 = vmatprep.subr.mxu0 0.0
  %330 = vmatpush2.msra.mxu0 0.0
  %331 = vmatprep.subr.mxu0 0.0
  %332 = vmatpush2.msra.mxu0 0.0
  %333 = vmatprep.subr.mxu0 0.0
  %334 = vmatpush2.msra.mxu0 0.0
  %335 = vmatprep.subr.mxu0 0.0
  %336 = vmatpush2.msra.mxu0 0.0
  %337 = vmatprep.subr.mxu0 0.0
  %338 = vmatpush2.msra.mxu0 0.0
  %339 = vmatprep.subr.mxu0 0.0
  %340 = vmatpush2.msra.mxu0 0.0
  %341 = vmatprep.subr.mxu0 0.0
  %342 = vmatpush2.msra.mxu0 0.0
  %343 = vmatprep.subr.mxu0 0.0
  %344 = vmatpush2.msra.mxu0 0.0
  %345 = vmatprep.subr.mxu0 0.0
  %346 = vmatpush2.msra.mxu0 0.0
  %347 = vmatprep.subr.mxu0 0.0
  %348 = vmatpush2.msra.mxu0 0.0
  %349 = vmatprep.subr.mxu0 0.0
  %350 = vmatpush2.msra.mxu0 0.0
  %351 = vmatprep.subr.mxu0 0.0
  %352 = vmatpush2.msra.mxu0 0.0
  %353 = vmatprep.subr.mxu0 0.0
  %354 = vmatpush2.msra.mxu0 0.0
  %355 = vmatprep.subr.mxu0 0.0
  %356 = vmatpush2.msra.mxu0 0.0
  %357 = vmatprep.subr.mxu0 0.0
  %358 = vmatpush2.msra.mxu0 0.0
  %359 = vmatprep.mubr.f32.mxu0 0.0
  %360 = vmatmul.mubr.f32.gmra.mxu0 %v100
  %v361 = vpop.f32.mrf.mxu0
  %v362 = vadd.f32 %v96, %v361
  %v363 = vpop.f32.mrf.mxu0
  %364 = vmatprep.mubr.f32.mxu0 0.0
  %365 = vmatmul.mubr.f32.gmra.mxu0 %v103
  %v366 = vpop.f32.mrf.mxu0
  %v367 = vadd.f32 %v96, %v366
  %v368 = vpop.f32.mrf.mxu0
  %369 = vmatprep.mubr.f32.mxu0 0.0
  %370 = vmatmul.mubr.f32.gmra.mxu0 %v106
  %v371 = vpop.f32.mrf.mxu0
  %v372 = vadd.f32 %v96, %v371
  %v373 = vpop.f32.mrf.mxu0
  %374 = vmatprep.mubr.f32.mxu0 0.0
  %375 = vmatmul.mubr.f32.gmra.mxu0 %v109
  %v376 = vpop.f32.mrf.mxu0
  %v377 = vadd.f32 %v96, %v376
  %v378 = vpop.f32.mrf.mxu0
  %379 = vmatprep.mubr.f32.mxu0 0.0
  %380 = vmatmul.mubr.f32.gmra.mxu0 %v112
  %v381 = vpop.f32.mrf.mxu0
  %v382 = vadd.f32 %v96, %v381
  %v383 = vpop.f32.mrf.mxu0
  %384 = vmatprep.mubr.f32.mxu0 0.0
  %385 = vmatmul.mubr.f32.gmra.mxu0 %v115
  %v386 = vpop.f32.mrf.mxu0
  %v387 = vadd.f32 %v96, %v386
  %v388 = vpop.f32.mrf.mxu0
  %389 = vmatprep.mubr.f32.mxu0 0.0
  %390 = vmatmul.mubr.f32.gmra.mxu0 %v118
  %v391 = vpop.f32.mrf.mxu0
  %v392 = vadd.f32 %v96, %v391
  %v393 = vpop.f32.mrf.mxu0
  %394 = vmatprep.mubr.f32.mxu0 0.0
  %395 = vmatmul.mubr.f32.gmra.mxu0 %v121
  %v396 = vpop.f32.mrf.mxu0
  %v397 = vadd.f32 %v96, %v396
  %v398 = vpop.f32.mrf.mxu0
  %399 = vmatprep.mubr.f32.mxu0 0.0
  %400 = vmatmul.mubr.f32.gmra.mxu0 %v124
  %v401 = vpop.f32.mrf.mxu0
  %v402 = vadd.f32 %v96, %v401
  %v403 = vpop.f32.mrf.mxu0
  %404 = vmatprep.mubr.f32.mxu0 0.0
  %405 = vmatmul.mubr.f32.gmra.mxu0 %v127
  %v406 = vpop.f32.mrf.mxu0
  %v407 = vadd.f32 %v96, %v406
  %v408 = vpop.f32.mrf.mxu0
  %409 = vmatprep.mubr.f32.mxu0 0.0
  %410 = vmatmul.mubr.f32.gmra.mxu0 %v130
  %v411 = vpop.f32.mrf.mxu0
  %v412 = vadd.f32 %v96, %v411
  %v413 = vpop.f32.mrf.mxu0
  %414 = vmatprep.mubr.f32.mxu0 0.0
  %415 = vmatmul.mubr.f32.gmra.mxu0 %v133
  %v416 = vpop.f32.mrf.mxu0
  %v417 = vadd.f32 %v96, %v416
  %v418 = vpop.f32.mrf.mxu0
  %419 = vmatprep.mubr.f32.mxu0 0.0
  %420 = vmatmul.mubr.f32.gmra.mxu0 %v136
  %v421 = vpop.f32.mrf.mxu0
  %v422 = vadd.f32 %v96, %v421
  %v423 = vpop.f32.mrf.mxu0
  %424 = vmatprep.mubr.f32.mxu0 0.0
  %425 = vmatmul.mubr.f32.gmra.mxu0 %v139
  %v426 = vpop.f32.mrf.mxu0
  %v427 = vadd.f32 %v96, %v426
  %v428 = vpop.f32.mrf.mxu0
  %429 = vmatprep.mubr.f32.mxu0 0.0
  %430 = vmatmul.mubr.f32.gmra.mxu0 %v142
  %v431 = vpop.f32.mrf.mxu0
  %v432 = vadd.f32 %v96, %v431
  %v433 = vpop.f32.mrf.mxu0
  %434 = vmatprep.mubr.f32.mxu0 0.0
  %435 = vmatmul.mubr.f32.gmra.mxu0 %v145
  %v436 = vpop.f32.mrf.mxu0
  %v437 = vadd.f32 %v96, %v436
  %v438 = vpop.f32.mrf.mxu0
  %439 = vmatprep.mubr.f32.mxu0 0.0
  %440 = vmatmul.mubr.f32.gmra.mxu0 %v148
  %v441 = vpop.f32.mrf.mxu0
  %v442 = vadd.f32 %v96, %v441
  %v443 = vpop.f32.mrf.mxu0
  %444 = vmatprep.mubr.f32.mxu0 0.0
  %445 = vmatmul.mubr.f32.gmra.mxu0 %v151
  %v446 = vpop.f32.mrf.mxu0
  %v447 = vadd.f32 %v96, %v446
  %v448 = vpop.f32.mrf.mxu0
  %449 = vmatprep.mubr.f32.mxu0 0.0
  %450 = vmatmul.mubr.f32.gmra.mxu0 %v154
  %v451 = vpop.f32.mrf.mxu0
  %v452 = vadd.f32 %v96, %v451
  %v453 = vpop.f32.mrf.mxu0
  %454 = vmatprep.mubr.f32.mxu0 0.0
  %455 = vmatmul.mubr.f32.gmra.mxu0 %v157
  %v456 = vpop.f32.mrf.mxu0
  %v457 = vadd.f32 %v96, %v456
  %v458 = vpop.f32.mrf.mxu0
  %459 = vmatprep.mubr.f32.mxu0 0.0
  %460 = vmatmul.mubr.f32.gmra.mxu0 %v160
  %v461 = vpop.f32.mrf.mxu0
  %v462 = vadd.f32 %v96, %v461
  %v463 = vpop.f32.mrf.mxu0
  %464 = vmatprep.mubr.f32.mxu0 0.0
  %465 = vmatmul.mubr.f32.gmra.mxu0 %v163
  %v466 = vpop.f32.mrf.mxu0
  %v467 = vadd.f32 %v96, %v466
  %v468 = vpop.f32.mrf.mxu0
  %469 = vmatprep.mubr.f32.mxu0 0.0
  %470 = vmatmul.mubr.f32.gmra.mxu0 %v166
  %v471 = vpop.f32.mrf.mxu0
  %v472 = vadd.f32 %v96, %v471
  %v473 = vpop.f32.mrf.mxu0
  %474 = vmatprep.mubr.f32.mxu0 0.0
  %475 = vmatmul.mubr.f32.gmra.mxu0 %v169
  %v476 = vpop.f32.mrf.mxu0
  %v477 = vadd.f32 %v96, %v476
  %v478 = vpop.f32.mrf.mxu0
  %479 = vmatprep.mubr.f32.mxu0 0.0
  %480 = vmatmul.mubr.f32.gmra.mxu0 %v172
  %v481 = vpop.f32.mrf.mxu0
  %v482 = vadd.f32 %v96, %v481
  %v483 = vpop.f32.mrf.mxu0
  %484 = vmatprep.mubr.f32.mxu0 0.0
  %485 = vmatmul.mubr.f32.gmra.mxu0 %v175
  %v486 = vpop.f32.mrf.mxu0
  %v487 = vadd.f32 %v96, %v486
  %v488 = vpop.f32.mrf.mxu0
  %489 = vmatprep.mubr.f32.mxu0 0.0
  %490 = vmatmul.mubr.f32.gmra.mxu0 %v178
  %v491 = vpop.f32.mrf.mxu0
  %v492 = vadd.f32 %v96, %v491
  %v493 = vpop.f32.mrf.mxu0
  %494 = vmatprep.mubr.f32.mxu0 0.0
  %495 = vmatmul.mubr.f32.gmra.mxu0 %v181
  %v496 = vpop.f32.mrf.mxu0
  %v497 = vadd.f32 %v96, %v496
  %v498 = vpop.f32.mrf.mxu0
  %499 = vmatprep.mubr.f32.mxu0 0.0
  %500 = vmatmul.mubr.f32.gmra.mxu0 %v184
  %v501 = vpop.f32.mrf.mxu0
  %v502 = vadd.f32 %v96, %v501
  %v503 = vpop.f32.mrf.mxu0
  %504 = vmatprep.mubr.f32.mxu0 0.0
  %505 = vmatmul.mubr.f32.gmra.mxu0 %v187
  %v506 = vpop.f32.mrf.mxu0
  %v507 = vadd.f32 %v96, %v506
  %v508 = vpop.f32.mrf.mxu0
  %509 = vmatprep.mubr.f32.mxu0 0.0
  %510 = vmatmul.mubr.f32.gmra.mxu0 %v190
  %v511 = vpop.f32.mrf.mxu0
  %v512 = vadd.f32 %v96, %v511
  %v513 = vpop.f32.mrf.mxu0
  %514 = vmatprep.mubr.f32.mxu0 0.0
  %515 = vmatmul.mubr.f32.gmra.mxu0 %v193
  %v516 = vpop.f32.mrf.mxu0
  %v517 = vadd.f32 %v96, %v516
  %v518 = vpop.f32.mrf.mxu0
  %519 = vmatprep.mubr.f32.mxu0 0.0
  %520 = vmatmul.mubr.f32.gmra.mxu0 %v196
  %v521 = vpop.f32.mrf.mxu0
  %v522 = vadd.f32 %v96, %v521
  %v523 = vpop.f32.mrf.mxu0
  %524 = vmatprep.mubr.f32.mxu0 0.0
  %525 = vmatmul.mubr.f32.gmra.mxu0 %v199
  %v526 = vpop.f32.mrf.mxu0
  %v527 = vadd.f32 %v96, %v526
  %v528 = vpop.f32.mrf.mxu0
  %529 = vmatprep.mubr.f32.mxu0 0.0
  %530 = vmatmul.mubr.f32.gmra.mxu0 %v202
  %v531 = vpop.f32.mrf.mxu0
  %v532 = vadd.f32 %v96, %v531
  %v533 = vpop.f32.mrf.mxu0
  %534 = vmatprep.mubr.f32.mxu0 0.0
  %535 = vmatmul.mubr.f32.gmra.mxu0 %v205
  %v536 = vpop.f32.mrf.mxu0
  %v537 = vadd.f32 %v96, %v536
  %v538 = vpop.f32.mrf.mxu0
  %539 = vmatprep.mubr.f32.mxu0 0.0
  %540 = vmatmul.mubr.f32.gmra.mxu0 %v208
  %v541 = vpop.f32.mrf.mxu0
  %v542 = vadd.f32 %v96, %v541
  %v543 = vpop.f32.mrf.mxu0
  %544 = vmatprep.mubr.f32.mxu0 0.0
  %545 = vmatmul.mubr.f32.gmra.mxu0 %v211
  %v546 = vpop.f32.mrf.mxu0
  %v547 = vadd.f32 %v96, %v546
  %v548 = vpop.f32.mrf.mxu0
  %549 = vmatprep.mubr.f32.mxu0 0.0
  %550 = vmatmul.mubr.f32.gmra.mxu0 %v214
  %v551 = vpop.f32.mrf.mxu0
  %v552 = vadd.f32 %v96, %v551
  %v553 = vpop.f32.mrf.mxu0
  %554 = vmatprep.mubr.f32.mxu0 0.0
  %555 = vmatmul.mubr.f32.gmra.mxu0 %v217
  %v556 = vpop.f32.mrf.mxu0
  %v557 = vadd.f32 %v96, %v556
  %v558 = vpop.f32.mrf.mxu0
  %559 = vmatprep.mubr.f32.mxu0 0.0
  %560 = vmatmul.mubr.f32.gmra.mxu0 %v220
  %v561 = vpop.f32.mrf.mxu0
  %v562 = vadd.f32 %v96, %v561
  %v563 = vpop.f32.mrf.mxu0
  %564 = vmatprep.mubr.f32.mxu0 0.0
  %565 = vmatmul.mubr.f32.gmra.mxu0 %v223
  %v566 = vpop.f32.mrf.mxu0
  %v567 = vadd.f32 %v96, %v566
  %v568 = vpop.f32.mrf.mxu0
  %569 = vmatprep.mubr.f32.mxu0 0.0
  %570 = vmatmul.mubr.f32.gmra.mxu0 %v226
  %v571 = vpop.f32.mrf.mxu0
  %v572 = vadd.f32 %v96, %v571
  %v573 = vpop.f32.mrf.mxu0
  %574 = vmatprep.mubr.f32.mxu0 0.0
  %575 = vmatmul.mubr.f32.gmra.mxu0 %v229
  %v576 = vpop.f32.mrf.mxu0
  %v577 = vadd.f32 %v96, %v576
  %v578 = vpop.f32.mrf.mxu0
  %579 = vmatprep.mubr.f32.mxu0 0.0
  %580 = vmatmul.mubr.f32.gmra.mxu0 %v232
  %v581 = vpop.f32.mrf.mxu0
  %v582 = vadd.f32 %v96, %v581
  %v583 = vpop.f32.mrf.mxu0
  %584 = vmatprep.mubr.f32.mxu0 0.0
  %585 = vmatmul.mubr.f32.gmra.mxu0 %v235
  %v586 = vpop.f32.mrf.mxu0
  %v587 = vadd.f32 %v96, %v586
  %v588 = vpop.f32.mrf.mxu0
  %589 = vmatprep.mubr.f32.mxu0 0.0
  %590 = vmatmul.mubr.f32.gmra.mxu0 %v238
  %v591 = vpop.f32.mrf.mxu0
  %v592 = vadd.f32 %v96, %v591
  %v593 = vpop.f32.mrf.mxu0
  %594 = vmatprep.mubr.f32.mxu0 0.0
  %595 = vmatmul.mubr.f32.gmra.mxu0 %v241
  %v596 = vpop.f32.mrf.mxu0
  %v597 = vadd.f32 %v96, %v596
  %v598 = vpop.f32.mrf.mxu0
  %599 = vmatprep.mubr.f32.mxu0 0.0
  %600 = vmatmul.mubr.f32.gmra.mxu0 %v244
  %v601 = vpop.f32.mrf.mxu0
  %v602 = vadd.f32 %v96, %v601
  %v603 = vpop.f32.mrf.mxu0
  %604 = vmatprep.mubr.f32.mxu0 0.0
  %605 = vmatmul.mubr.f32.gmra.mxu0 %v247
  %v606 = vpop.f32.mrf.mxu0
  %v607 = vadd.f32 %v96, %v606
  %v608 = vpop.f32.mrf.mxu0
  %609 = vmatprep.mubr.f32.mxu0 0.0
  %610 = vmatmul.mubr.f32.gmra.mxu0 %v250
  %v611 = vpop.f32.mrf.mxu0
  %v612 = vadd.f32 %v96, %v611
  %v613 = vpop.f32.mrf.mxu0
  %614 = vmatprep.mubr.f32.mxu0 0.0
  %615 = vmatmul.mubr.f32.gmra.mxu0 %v253
  %v616 = vpop.f32.mrf.mxu0
  %v617 = vadd.f32 %v96, %v616
  %v618 = vpop.f32.mrf.mxu0
  %619 = vmatprep.mubr.f32.mxu0 0.0
  %620 = vmatmul.mubr.f32.gmra.mxu0 %v256
  %v621 = vpop.f32.mrf.mxu0
  %v622 = vadd.f32 %v96, %v621
  %v623 = vpop.f32.mrf.mxu0
  %624 = vmatprep.mubr.f32.mxu0 0.0
  %625 = vmatmul.mubr.f32.gmra.mxu0 %v259
  %v626 = vpop.f32.mrf.mxu0
  %v627 = vadd.f32 %v96, %v626
  %v628 = vpop.f32.mrf.mxu0
  %629 = vmatprep.mubr.f32.mxu0 0.0
  %630 = vmatmul.mubr.f32.gmra.mxu0 %v262
  %v631 = vpop.f32.mrf.mxu0
  %v632 = vadd.f32 %v96, %v631
  %v633 = vpop.f32.mrf.mxu0
  %634 = vmatprep.mubr.f32.mxu0 0.0
  %635 = vmatmul.mubr.f32.gmra.mxu0 %v265
  %v636 = vpop.f32.mrf.mxu0
  %v637 = vadd.f32 %v96, %v636
  %v638 = vpop.f32.mrf.mxu0
  %639 = vmatprep.mubr.f32.mxu0 0.0
  %640 = vmatmul.mubr.f32.gmra.mxu0 %v268
  %v641 = vpop.f32.mrf.mxu0
  %v642 = vadd.f32 %v96, %v641
  %v643 = vpop.f32.mrf.mxu0
  %644 = vmatprep.mubr.f32.mxu0 0.0
  %645 = vmatmul.mubr.f32.gmra.mxu0 %v271
  %v646 = vpop.f32.mrf.mxu0
  %v647 = vadd.f32 %v96, %v646
  %v648 = vpop.f32.mrf.mxu0
  %649 = vmatprep.mubr.f32.mxu0 0.0
  %650 = vmatmul.mubr.f32.gmra.mxu0 %v274
  %v651 = vpop.f32.mrf.mxu0
  %v652 = vadd.f32 %v96, %v651
  %v653 = vpop.f32.mrf.mxu0
  %654 = vmatprep.mubr.f32.mxu0 0.0
  %655 = vmatmul.mubr.f32.gmra.mxu0 %v277
  %v656 = vpop.f32.mrf.mxu0
  %v657 = vadd.f32 %v96, %v656
  %v658 = vpop.f32.mrf.mxu0
  %659 = vmatprep.mubr.f32.mxu0 0.0
  %660 = vmatmul.mubr.f32.gmra.mxu0 %v280
  %v661 = vpop.f32.mrf.mxu0
  %v662 = vadd.f32 %v96, %v661
  %v663 = vpop.f32.mrf.mxu0
  %664 = vmatprep.mubr.f32.mxu0 0.0
  %665 = vmatmul.mubr.f32.gmra.mxu0 %v283
  %v666 = vpop.f32.mrf.mxu0
  %v667 = vadd.f32 %v96, %v666
  %v668 = vpop.f32.mrf.mxu0
  %669 = vmatprep.mubr.f32.mxu0 0.0
  %670 = vmatmul.mubr.f32.gmra.mxu0 %v286
  %v671 = vpop.f32.mrf.mxu0
  %v672 = vadd.f32 %v96, %v671
  %v673 = vpop.f32.mrf.mxu0
  %674 = vmatprep.mubr.f32.mxu0 0.0
  %675 = vmatmul.mubr.f32.gmra.mxu0 %v289
  %v676 = vpop.f32.mrf.mxu0
  %v677 = vadd.f32 %v96, %v676
  %v678 = vpop.f32.mrf.mxu0
  %679 = vdwg.mxu0
  %v680 = vmax.f32 %v362, 0.0
  %v681 = vmax.f32 %v367, 0.0
  %v682 = vmax.f32 %v372, 0.0
  %v683 = vmax.f32 %v377, 0.0
  %v684 = vmax.f32 %v382, 0.0
  %v685 = vmax.f32 %v387, 0.0
  %v686 = vmax.f32 %v392, 0.0
  %v687 = vmax.f32 %v397, 0.0
  %v688 = vmax.f32 %v402, 0.0
  %v689 = vmax.f32 %v407, 0.0
  %v690 = vmax.f32 %v412, 0.0
  %v691 = vmax.f32 %v417, 0.0
  %v692 = vmax.f32 %v422, 0.0
  %v693 = vmax.f32 %v427, 0.0
  %v694 = vmax.f32 %v432, 0.0
  %v695 = vmax.f32 %v437, 0.0
  %v696 = vmax.f32 %v442, 0.0
  %v697 = vmax.f32 %v447, 0.0
  %v698 = vmax.f32 %v452, 0.0
  %v699 = vmax.f32 %v457, 0.0
  %v700 = vmax.f32 %v462, 0.0
  %v701 = vmax.f32 %v467, 0.0
  %v702 = vmax.f32 %v472, 0.0
  %v703 = vmax.f32 %v477, 0.0
  %v704 = vmax.f32 %v482, 0.0
  %v705 = vmax.f32 %v487, 0.0
  %v706 = vmax.f32 %v492, 0.0
  %v707 = vmax.f32 %v497, 0.0
  %v708 = vmax.f32 %v502, 0.0
  %v709 = vmax.f32 %v507, 0.0
  %v710 = vmax.f32 %v512, 0.0
  %v711 = vmax.f32 %v517, 0.0
  %v712 = vmax.f32 %v522, 0.0
  %v713 = vmax.f32 %v527, 0.0
  %v714 = vmax.f32 %v532, 0.0
  %v715 = vmax.f32 %v537, 0.0
  %v716 = vmax.f32 %v542, 0.0
  %v717 = vmax.f32 %v547, 0.0
  %v718 = vmax.f32 %v552, 0.0
  %v719 = vmax.f32 %v557, 0.0
  %v720 = vmax.f32 %v562, 0.0
  %v721 = vmax.f32 %v567, 0.0
  %v722 = vmax.f32 %v572, 0.0
  %v723 = vmax.f32 %v577, 0.0
  %v724 = vmax.f32 %v582, 0.0
  %v725 = vmax.f32 %v587, 0.0
  %v726 = vmax.f32 %v592, 0.0
  %v727 = vmax.f32 %v597, 0.0
  %v728 = vmax.f32 %v602, 0.0
  %v729 = vmax.f32 %v607, 0.0
  %v730 = vmax.f32 %v612, 0.0
  %v731 = vmax.f32 %v617, 0.0
  %v732 = vmax.f32 %v622, 0.0
  %v733 = vmax.f32 %v627, 0.0
  %v734 = vmax.f32 %v632, 0.0
  %v735 = vmax.f32 %v637, 0.0
  %v736 = vmax.f32 %v642, 0.0
  %v737 = vmax.f32 %v647, 0.0
  %v738 = vmax.f32 %v652, 0.0
  %v739 = vmax.f32 %v657, 0.0
  %v740 = vmax.f32 %v662, 0.0
  %v741 = vmax.f32 %v667, 0.0
  %v742 = vmax.f32 %v672, 0.0
  %v743 = vmax.f32 %v677, 0.0
  %v744 = vld [vmem:[%s3] sm:$0xff]
  %v745 = vld [vmem:[%s4] sm:$0x1]
  %v747 = vlaneseq
  %v748 = vshrl.u32 %v747, 7
  %v749 = vsub.s32 0, %v748
  %v750 = vrot.slane %v745, %v749
  %vm752 = vcmask 64512
  %v754 = vsel %vm752, %v680, 0
  %v757 = vsel %vm752, %v681, 0
  %v760 = vsel %vm752, %v682, 0
  %v763 = vsel %vm752, %v683, 0
  %v766 = vsel %vm752, %v684, 0
  %v769 = vsel %vm752, %v685, 0
  %v772 = vsel %vm752, %v686, 0
  %v775 = vsel %vm752, %v687, 0
  %v778 = vsel %vm752, %v688, 0
  %v781 = vsel %vm752, %v689, 0
  %v784 = vsel %vm752, %v690, 0
  %v787 = vsel %vm752, %v691, 0
  %v790 = vsel %vm752, %v692, 0
  %v793 = vsel %vm752, %v693, 0
  %v796 = vsel %vm752, %v694, 0
  %v799 = vsel %vm752, %v695, 0
  %v802 = vsel %vm752, %v696, 0
  %v805 = vsel %vm752, %v697, 0
  %v808 = vsel %vm752, %v698, 0
  %v811 = vsel %vm752, %v699, 0
  %v814 = vsel %vm752, %v700, 0
  %v817 = vsel %vm752, %v701, 0
  %v820 = vsel %vm752, %v702, 0
  %v823 = vsel %vm752, %v703, 0
  %v826 = vsel %vm752, %v704, 0
  %v829 = vsel %vm752, %v705, 0
  %v832 = vsel %vm752, %v706, 0
  %v835 = vsel %vm752, %v707, 0
  %v838 = vsel %vm752, %v708, 0
  %v841 = vsel %vm752, %v709, 0
  %v844 = vsel %vm752, %v710, 0
  %v847 = vsel %vm752, %v711, 0
  %v850 = vsel %vm752, %v712, 0
  %v853 = vsel %vm752, %v713, 0
  %v856 = vsel %vm752, %v714, 0
  %v859 = vsel %vm752, %v715, 0
  %v862 = vsel %vm752, %v716, 0
  %v865 = vsel %vm752, %v717, 0
  %v868 = vsel %vm752, %v718, 0
  %v871 = vsel %vm752, %v719, 0
  %v874 = vsel %vm752, %v720, 0
  %v877 = vsel %vm752, %v721, 0
  %v880 = vsel %vm752, %v722, 0
  %v883 = vsel %vm752, %v723, 0
  %v886 = vsel %vm752, %v724, 0
  %v889 = vsel %vm752, %v725, 0
  %v892 = vsel %vm752, %v726, 0
  %v895 = vsel %vm752, %v727, 0
  %v898 = vsel %vm752, %v728, 0
  %v901 = vsel %vm752, %v729, 0
  %v904 = vsel %vm752, %v730, 0
  %v907 = vsel %vm752, %v731, 0
  %v910 = vsel %vm752, %v732, 0
  %v913 = vsel %vm752, %v733, 0
  %v916 = vsel %vm752, %v734, 0
  %v919 = vsel %vm752, %v735, 0
  %v922 = vsel %vm752, %v736, 0
  %v925 = vsel %vm752, %v737, 0
  %v928 = vsel %vm752, %v738, 0
  %v931 = vsel %vm752, %v739, 0
  %v934 = vsel %vm752, %v740, 0
  %v937 = vsel %vm752, %v741, 0
  %v940 = vsel %vm752, %v742, 0
  %v943 = vsel %vm752, %v743, 0
  %945 = vmatprep.subr.mxu0 0.0
  %946 = vmatpush1.msra.mxu0 0.0
  %947 = vmatprep.subr.mxu0 0.0
  %948 = vmatpush1.msra.mxu0 0.0
  %949 = vmatprep.subr.mxu0 0.0
  %950 = vmatpush1.msra.mxu0 0.0
  %951 = vmatprep.subr.mxu0 0.0
  %952 = vmatpush1.msra.mxu0 0.0
  %953 = vmatprep.subr.mxu0 0.0
  %954 = vmatpush1.msra.mxu0 0.0
  %955 = vmatprep.subr.mxu0 0.0
  %956 = vmatpush1.msra.mxu0 0.0
  %957 = vmatprep.subr.mxu0 0.0
  %958 = vmatpush1.msra.mxu0 0.0
  %959 = vmatprep.subr.mxu0 0.0
  %960 = vmatpush1.msra.mxu0 0.0
  %961 = vmatprep.subr.mxu0 0.0
  %962 = vmatpush1.msra.mxu0 0.0
  %963 = vmatprep.subr.mxu0 0.0
  %964 = vmatpush1.msra.mxu0 0.0
  %965 = vmatprep.subr.mxu0 0.0
  %966 = vmatpush1.msra.mxu0 0.0
  %967 = vmatprep.subr.mxu0 0.0
  %968 = vmatpush1.msra.mxu0 0.0
  %969 = vmatprep.subr.mxu0 0.0
  %970 = vmatpush1.msra.mxu0 0.0
  %971 = vmatprep.subr.mxu0 0.0
  %972 = vmatpush1.msra.mxu0 0.0
  %973 = vmatprep.subr.mxu0 0.0
  %974 = vmatpush1.msra.mxu0 0.0
  %975 = vmatprep.subr.mxu0 0.0
  %976 = vmatpush1.msra.mxu0 %v744
  %977 = vmatprep.subr.mxu0 0.0
  %978 = vmatpush2.msra.mxu0 0.0
  %979 = vmatprep.subr.mxu0 0.0
  %980 = vmatpush2.msra.mxu0 0.0
  %981 = vmatprep.subr.mxu0 0.0
  %982 = vmatpush2.msra.mxu0 0.0
  %983 = vmatprep.subr.mxu0 0.0
  %984 = vmatpush2.msra.mxu0 0.0
  %985 = vmatprep.subr.mxu0 0.0
  %986 = vmatpush2.msra.mxu0 0.0
  %987 = vmatprep.subr.mxu0 0.0
  %988 = vmatpush2.msra.mxu0 0.0
  %989 = vmatprep.subr.mxu0 0.0
  %990 = vmatpush2.msra.mxu0 0.0
  %991 = vmatprep.subr.mxu0 0.0
  %992 = vmatpush2.msra.mxu0 0.0
  %993 = vmatprep.subr.mxu0 0.0
  %994 = vmatpush2.msra.mxu0 0.0
  %995 = vmatprep.subr.mxu0 0.0
  %996 = vmatpush2.msra.mxu0 0.0
  %997 = vmatprep.subr.mxu0 0.0
  %998 = vmatpush2.msra.mxu0 0.0
  %999 = vmatprep.subr.mxu0 0.0
  %1000 = vmatpush2.msra.mxu0 0.0
  %1001 = vmatprep.subr.mxu0 0.0
  %1002 = vmatpush2.msra.mxu0 0.0
  %1003 = vmatprep.subr.mxu0 0.0
  %1004 = vmatpush2.msra.mxu0 0.0
  %1005 = vmatprep.subr.mxu0 0.0
  %1006 = vmatpush2.msra.mxu0 0.0
  %1007 = vmatprep.subr.mxu0 0.0
  %1008 = vmatpush2.msra.mxu0 0.0
  %1009 = vmatprep.mubr.f32.mxu0 0.0
  %1010 = vmatmul.mubr.f32.gmra.mxu0 %v754
  %v1011 = vpop.f32.mrf.mxu0
  %v1012 = vadd.f32 %v750, %v1011
  %v1013 = vpop.f32.mrf.mxu0
  %1014 = vmatprep.mubr.f32.mxu0 0.0
  %1015 = vmatmul.mubr.f32.gmra.mxu0 %v757
  %v1016 = vpop.f32.mrf.mxu0
  %v1017 = vadd.f32 %v750, %v1016
  %v1018 = vpop.f32.mrf.mxu0
  %1019 = vmatprep.mubr.f32.mxu0 0.0
  %1020 = vmatmul.mubr.f32.gmra.mxu0 %v760
  %v1021 = vpop.f32.mrf.mxu0
  %v1022 = vadd.f32 %v750, %v1021
  %v1023 = vpop.f32.mrf.mxu0
  %1024 = vmatprep.mubr.f32.mxu0 0.0
  %1025 = vmatmul.mubr.f32.gmra.mxu0 %v763
  %v1026 = vpop.f32.mrf.mxu0
  %v1027 = vadd.f32 %v750, %v1026
  %v1028 = vpop.f32.mrf.mxu0
  %1029 = vmatprep.mubr.f32.mxu0 0.0
  %1030 = vmatmul.mubr.f32.gmra.mxu0 %v766
  %v1031 = vpop.f32.mrf.mxu0
  %v1032 = vadd.f32 %v750, %v1031
  %v1033 = vpop.f32.mrf.mxu0
  %1034 = vmatprep.mubr.f32.mxu0 0.0
  %1035 = vmatmul.mubr.f32.gmra.mxu0 %v769
  %v1036 = vpop.f32.mrf.mxu0
  %v1037 = vadd.f32 %v750, %v1036
  %v1038 = vpop.f32.mrf.mxu0
  %1039 = vmatprep.mubr.f32.mxu0 0.0
  %1040 = vmatmul.mubr.f32.gmra.mxu0 %v772
  %v1041 = vpop.f32.mrf.mxu0
  %v1042 = vadd.f32 %v750, %v1041
  %v1043 = vpop.f32.mrf.mxu0
  %1044 = vmatprep.mubr.f32.mxu0 0.0
  %1045 = vmatmul.mubr.f32.gmra.mxu0 %v775
  %v1046 = vpop.f32.mrf.mxu0
  %v1047 = vadd.f32 %v750, %v1046
  %v1048 = vpop.f32.mrf.mxu0
  %1049 = vmatprep.mubr.f32.mxu0 0.0
  %1050 = vmatmul.mubr.f32.gmra.mxu0 %v778
  %v1051 = vpop.f32.mrf.mxu0
  %v1052 = vadd.f32 %v750, %v1051
  %v1053 = vpop.f32.mrf.mxu0
  %1054 = vmatprep.mubr.f32.mxu0 0.0
  %1055 = vmatmul.mubr.f32.gmra.mxu0 %v781
  %v1056 = vpop.f32.mrf.mxu0
  %v1057 = vadd.f32 %v750, %v1056
  %v1058 = vpop.f32.mrf.mxu0
  %1059 = vmatprep.mubr.f32.mxu0 0.0
  %1060 = vmatmul.mubr.f32.gmra.mxu0 %v784
  %v1061 = vpop.f32.mrf.mxu0
  %v1062 = vadd.f32 %v750, %v1061
  %v1063 = vpop.f32.mrf.mxu0
  %1064 = vmatprep.mubr.f32.mxu0 0.0
  %1065 = vmatmul.mubr.f32.gmra.mxu0 %v787
  %v1066 = vpop.f32.mrf.mxu0
  %v1067 = vadd.f32 %v750, %v1066
  %v1068 = vpop.f32.mrf.mxu0
  %1069 = vmatprep.mubr.f32.mxu0 0.0
  %1070 = vmatmul.mubr.f32.gmra.mxu0 %v790
  %v1071 = vpop.f32.mrf.mxu0
  %v1072 = vadd.f32 %v750, %v1071
  %v1073 = vpop.f32.mrf.mxu0
  %1074 = vmatprep.mubr.f32.mxu0 0.0
  %1075 = vmatmul.mubr.f32.gmra.mxu0 %v793
  %v1076 = vpop.f32.mrf.mxu0
  %v1077 = vadd.f32 %v750, %v1076
  %v1078 = vpop.f32.mrf.mxu0
  %1079 = vmatprep.mubr.f32.mxu0 0.0
  %1080 = vmatmul.mubr.f32.gmra.mxu0 %v796
  %v1081 = vpop.f32.mrf.mxu0
  %v1082 = vadd.f32 %v750, %v1081
  %v1083 = vpop.f32.mrf.mxu0
  %1084 = vmatprep.mubr.f32.mxu0 0.0
  %1085 = vmatmul.mubr.f32.gmra.mxu0 %v799
  %v1086 = vpop.f32.mrf.mxu0
  %v1087 = vadd.f32 %v750, %v1086
  %v1088 = vpop.f32.mrf.mxu0
  %1089 = vmatprep.mubr.f32.mxu0 0.0
  %1090 = vmatmul.mubr.f32.gmra.mxu0 %v802
  %v1091 = vpop.f32.mrf.mxu0
  %v1092 = vadd.f32 %v750, %v1091
  %v1093 = vpop.f32.mrf.mxu0
  %1094 = vmatprep.mubr.f32.mxu0 0.0
  %1095 = vmatmul.mubr.f32.gmra.mxu0 %v805
  %v1096 = vpop.f32.mrf.mxu0
  %v1097 = vadd.f32 %v750, %v1096
  %v1098 = vpop.f32.mrf.mxu0
  %1099 = vmatprep.mubr.f32.mxu0 0.0
  %1100 = vmatmul.mubr.f32.gmra.mxu0 %v808
  %v1101 = vpop.f32.mrf.mxu0
  %v1102 = vadd.f32 %v750, %v1101
  %v1103 = vpop.f32.mrf.mxu0
  %1104 = vmatprep.mubr.f32.mxu0 0.0
  %1105 = vmatmul.mubr.f32.gmra.mxu0 %v811
  %v1106 = vpop.f32.mrf.mxu0
  %v1107 = vadd.f32 %v750, %v1106
  %v1108 = vpop.f32.mrf.mxu0
  %1109 = vmatprep.mubr.f32.mxu0 0.0
  %1110 = vmatmul.mubr.f32.gmra.mxu0 %v814
  %v1111 = vpop.f32.mrf.mxu0
  %v1112 = vadd.f32 %v750, %v1111
  %v1113 = vpop.f32.mrf.mxu0
  %1114 = vmatprep.mubr.f32.mxu0 0.0
  %1115 = vmatmul.mubr.f32.gmra.mxu0 %v817
  %v1116 = vpop.f32.mrf.mxu0
  %v1117 = vadd.f32 %v750, %v1116
  %v1118 = vpop.f32.mrf.mxu0
  %1119 = vmatprep.mubr.f32.mxu0 0.0
  %1120 = vmatmul.mubr.f32.gmra.mxu0 %v820
  %v1121 = vpop.f32.mrf.mxu0
  %v1122 = vadd.f32 %v750, %v1121
  %v1123 = vpop.f32.mrf.mxu0
  %1124 = vmatprep.mubr.f32.mxu0 0.0
  %1125 = vmatmul.mubr.f32.gmra.mxu0 %v823
  %v1126 = vpop.f32.mrf.mxu0
  %v1127 = vadd.f32 %v750, %v1126
  %v1128 = vpop.f32.mrf.mxu0
  %1129 = vmatprep.mubr.f32.mxu0 0.0
  %1130 = vmatmul.mubr.f32.gmra.mxu0 %v826
  %v1131 = vpop.f32.mrf.mxu0
  %v1132 = vadd.f32 %v750, %v1131
  %v1133 = vpop.f32.mrf.mxu0
  %1134 = vmatprep.mubr.f32.mxu0 0.0
  %1135 = vmatmul.mubr.f32.gmra.mxu0 %v829
  %v1136 = vpop.f32.mrf.mxu0
  %v1137 = vadd.f32 %v750, %v1136
  %v1138 = vpop.f32.mrf.mxu0
  %1139 = vmatprep.mubr.f32.mxu0 0.0
  %1140 = vmatmul.mubr.f32.gmra.mxu0 %v832
  %v1141 = vpop.f32.mrf.mxu0
  %v1142 = vadd.f32 %v750, %v1141
  %v1143 = vpop.f32.mrf.mxu0
  %1144 = vmatprep.mubr.f32.mxu0 0.0
  %1145 = vmatmul.mubr.f32.gmra.mxu0 %v835
  %v1146 = vpop.f32.mrf.mxu0
  %v1147 = vadd.f32 %v750, %v1146
  %v1148 = vpop.f32.mrf.mxu0
  %1149 = vmatprep.mubr.f32.mxu0 0.0
  %1150 = vmatmul.mubr.f32.gmra.mxu0 %v838
  %v1151 = vpop.f32.mrf.mxu0
  %v1152 = vadd.f32 %v750, %v1151
  %v1153 = vpop.f32.mrf.mxu0
  %1154 = vmatprep.mubr.f32.mxu0 0.0
  %1155 = vmatmul.mubr.f32.gmra.mxu0 %v841
  %v1156 = vpop.f32.mrf.mxu0
  %v1157 = vadd.f32 %v750, %v1156
  %v1158 = vpop.f32.mrf.mxu0
  %1159 = vmatprep.mubr.f32.mxu0 0.0
  %1160 = vmatmul.mubr.f32.gmra.mxu0 %v844
  %v1161 = vpop.f32.mrf.mxu0
  %v1162 = vadd.f32 %v750, %v1161
  %v1163 = vpop.f32.mrf.mxu0
  %1164 = vmatprep.mubr.f32.mxu0 0.0
  %1165 = vmatmul.mubr.f32.gmra.mxu0 %v847
  %v1166 = vpop.f32.mrf.mxu0
  %v1167 = vadd.f32 %v750, %v1166
  %v1168 = vpop.f32.mrf.mxu0
  %1169 = vmatprep.mubr.f32.mxu0 0.0
  %1170 = vmatmul.mubr.f32.gmra.mxu0 %v850
  %v1171 = vpop.f32.mrf.mxu0
  %v1172 = vadd.f32 %v750, %v1171
  %v1173 = vpop.f32.mrf.mxu0
  %1174 = vmatprep.mubr.f32.mxu0 0.0
  %1175 = vmatmul.mubr.f32.gmra.mxu0 %v853
  %v1176 = vpop.f32.mrf.mxu0
  %v1177 = vadd.f32 %v750, %v1176
  %v1178 = vpop.f32.mrf.mxu0
  %1179 = vmatprep.mubr.f32.mxu0 0.0
  %1180 = vmatmul.mubr.f32.gmra.mxu0 %v856
  %v1181 = vpop.f32.mrf.mxu0
  %v1182 = vadd.f32 %v750, %v1181
  %v1183 = vpop.f32.mrf.mxu0
  %1184 = vmatprep.mubr.f32.mxu0 0.0
  %1185 = vmatmul.mubr.f32.gmra.mxu0 %v859
  %v1186 = vpop.f32.mrf.mxu0
  %v1187 = vadd.f32 %v750, %v1186
  %v1188 = vpop.f32.mrf.mxu0
  %1189 = vmatprep.mubr.f32.mxu0 0.0
  %1190 = vmatmul.mubr.f32.gmra.mxu0 %v862
  %v1191 = vpop.f32.mrf.mxu0
  %v1192 = vadd.f32 %v750, %v1191
  %v1193 = vpop.f32.mrf.mxu0
  %1194 = vmatprep.mubr.f32.mxu0 0.0
  %1195 = vmatmul.mubr.f32.gmra.mxu0 %v865
  %v1196 = vpop.f32.mrf.mxu0
  %v1197 = vadd.f32 %v750, %v1196
  %v1198 = vpop.f32.mrf.mxu0
  %1199 = vmatprep.mubr.f32.mxu0 0.0
  %1200 = vmatmul.mubr.f32.gmra.mxu0 %v868
  %v1201 = vpop.f32.mrf.mxu0
  %v1202 = vadd.f32 %v750, %v1201
  %v1203 = vpop.f32.mrf.mxu0
  %1204 = vmatprep.mubr.f32.mxu0 0.0
  %1205 = vmatmul.mubr.f32.gmra.mxu0 %v871
  %v1206 = vpop.f32.mrf.mxu0
  %v1207 = vadd.f32 %v750, %v1206
  %v1208 = vpop.f32.mrf.mxu0
  %1209 = vmatprep.mubr.f32.mxu0 0.0
  %1210 = vmatmul.mubr.f32.gmra.mxu0 %v874
  %v1211 = vpop.f32.mrf.mxu0
  %v1212 = vadd.f32 %v750, %v1211
  %v1213 = vpop.f32.mrf.mxu0
  %1214 = vmatprep.mubr.f32.mxu0 0.0
  %1215 = vmatmul.mubr.f32.gmra.mxu0 %v877
  %v1216 = vpop.f32.mrf.mxu0
  %v1217 = vadd.f32 %v750, %v1216
  %v1218 = vpop.f32.mrf.mxu0
  %1219 = vmatprep.mubr.f32.mxu0 0.0
  %1220 = vmatmul.mubr.f32.gmra.mxu0 %v880
  %v1221 = vpop.f32.mrf.mxu0
  %v1222 = vadd.f32 %v750, %v1221
  %v1223 = vpop.f32.mrf.mxu0
  %1224 = vmatprep.mubr.f32.mxu0 0.0
  %1225 = vmatmul.mubr.f32.gmra.mxu0 %v883
  %v1226 = vpop.f32.mrf.mxu0
  %v1227 = vadd.f32 %v750, %v1226
  %v1228 = vpop.f32.mrf.mxu0
  %1229 = vmatprep.mubr.f32.mxu0 0.0
  %1230 = vmatmul.mubr.f32.gmra.mxu0 %v886
  %v1231 = vpop.f32.mrf.mxu0
  %v1232 = vadd.f32 %v750, %v1231
  %v1233 = vpop.f32.mrf.mxu0
  %1234 = vmatprep.mubr.f32.mxu0 0.0
  %1235 = vmatmul.mubr.f32.gmra.mxu0 %v889
  %v1236 = vpop.f32.mrf.mxu0
  %v1237 = vadd.f32 %v750, %v1236
  %v1238 = vpop.f32.mrf.mxu0
  %1239 = vmatprep.mubr.f32.mxu0 0.0
  %1240 = vmatmul.mubr.f32.gmra.mxu0 %v892
  %v1241 = vpop.f32.mrf.mxu0
  %v1242 = vadd.f32 %v750, %v1241
  %v1243 = vpop.f32.mrf.mxu0
  %1244 = vmatprep.mubr.f32.mxu0 0.0
  %1245 = vmatmul.mubr.f32.gmra.mxu0 %v895
  %v1246 = vpop.f32.mrf.mxu0
  %v1247 = vadd.f32 %v750, %v1246
  %v1248 = vpop.f32.mrf.mxu0
  %1249 = vmatprep.mubr.f32.mxu0 0.0
  %1250 = vmatmul.mubr.f32.gmra.mxu0 %v898
  %v1251 = vpop.f32.mrf.mxu0
  %v1252 = vadd.f32 %v750, %v1251
  %v1253 = vpop.f32.mrf.mxu0
  %1254 = vmatprep.mubr.f32.mxu0 0.0
  %1255 = vmatmul.mubr.f32.gmra.mxu0 %v901
  %v1256 = vpop.f32.mrf.mxu0
  %v1257 = vadd.f32 %v750, %v1256
  %v1258 = vpop.f32.mrf.mxu0
  %1259 = vmatprep.mubr.f32.mxu0 0.0
  %1260 = vmatmul.mubr.f32.gmra.mxu0 %v904
  %v1261 = vpop.f32.mrf.mxu0
  %v1262 = vadd.f32 %v750, %v1261
  %v1263 = vpop.f32.mrf.mxu0
  %1264 = vmatprep.mubr.f32.mxu0 0.0
  %1265 = vmatmul.mubr.f32.gmra.mxu0 %v907
  %v1266 = vpop.f32.mrf.mxu0
  %v1267 = vadd.f32 %v750, %v1266
  %v1268 = vpop.f32.mrf.mxu0
  %1269 = vmatprep.mubr.f32.mxu0 0.0
  %1270 = vmatmul.mubr.f32.gmra.mxu0 %v910
  %v1271 = vpop.f32.mrf.mxu0
  %v1272 = vadd.f32 %v750, %v1271
  %v1273 = vpop.f32.mrf.mxu0
  %1274 = vmatprep.mubr.f32.mxu0 0.0
  %1275 = vmatmul.mubr.f32.gmra.mxu0 %v913
  %v1276 = vpop.f32.mrf.mxu0
  %v1277 = vadd.f32 %v750, %v1276
  %v1278 = vpop.f32.mrf.mxu0
  %1279 = vmatprep.mubr.f32.mxu0 0.0
  %1280 = vmatmul.mubr.f32.gmra.mxu0 %v916
  %v1281 = vpop.f32.mrf.mxu0
  %v1282 = vadd.f32 %v750, %v1281
  %v1283 = vpop.f32.mrf.mxu0
  %1284 = vmatprep.mubr.f32.mxu0 0.0
  %1285 = vmatmul.mubr.f32.gmra.mxu0 %v919
  %v1286 = vpop.f32.mrf.mxu0
  %v1287 = vadd.f32 %v750, %v1286
  %v1288 = vpop.f32.mrf.mxu0
  %1289 = vmatprep.mubr.f32.mxu0 0.0
  %1290 = vmatmul.mubr.f32.gmra.mxu0 %v922
  %v1291 = vpop.f32.mrf.mxu0
  %v1292 = vadd.f32 %v750, %v1291
  %v1293 = vpop.f32.mrf.mxu0
  %1294 = vmatprep.mubr.f32.mxu0 0.0
  %1295 = vmatmul.mubr.f32.gmra.mxu0 %v925
  %v1296 = vpop.f32.mrf.mxu0
  %v1297 = vadd.f32 %v750, %v1296
  %v1298 = vpop.f32.mrf.mxu0
  %1299 = vmatprep.mubr.f32.mxu0 0.0
  %1300 = vmatmul.mubr.f32.gmra.mxu0 %v928
  %v1301 = vpop.f32.mrf.mxu0
  %v1302 = vadd.f32 %v750, %v1301
  %v1303 = vpop.f32.mrf.mxu0
  %1304 = vmatprep.mubr.f32.mxu0 0.0
  %1305 = vmatmul.mubr.f32.gmra.mxu0 %v931
  %v1306 = vpop.f32.mrf.mxu0
  %v1307 = vadd.f32 %v750, %v1306
  %v1308 = vpop.f32.mrf.mxu0
  %1309 = vmatprep.mubr.f32.mxu0 0.0
  %1310 = vmatmul.mubr.f32.gmra.mxu0 %v934
  %v1311 = vpop.f32.mrf.mxu0
  %v1312 = vadd.f32 %v750, %v1311
  %v1313 = vpop.f32.mrf.mxu0
  %1314 = vmatprep.mubr.f32.mxu0 0.0
  %1315 = vmatmul.mubr.f32.gmra.mxu0 %v937
  %v1316 = vpop.f32.mrf.mxu0
  %v1317 = vadd.f32 %v750, %v1316
  %v1318 = vpop.f32.mrf.mxu0
  %1319 = vmatprep.mubr.f32.mxu0 0.0
  %1320 = vmatmul.mubr.f32.gmra.mxu0 %v940
  %v1321 = vpop.f32.mrf.mxu0
  %v1322 = vadd.f32 %v750, %v1321
  %v1323 = vpop.f32.mrf.mxu0
  %1324 = vmatprep.mubr.f32.mxu0 0.0
  %1325 = vmatmul.mubr.f32.gmra.mxu0 %v943
  %v1326 = vpop.f32.mrf.mxu0
  %v1327 = vadd.f32 %v750, %v1326
  %v1328 = vpop.f32.mrf.mxu0
  %1329 = vdwg.mxu0
  %v1330 = vmax.f32 %v1012, 0.0
  %v1331 = vmax.f32 %v1017, 0.0
  %v1332 = vmax.f32 %v1022, 0.0
  %v1333 = vmax.f32 %v1027, 0.0
  %v1334 = vmax.f32 %v1032, 0.0
  %v1335 = vmax.f32 %v1037, 0.0
  %v1336 = vmax.f32 %v1042, 0.0
  %v1337 = vmax.f32 %v1047, 0.0
  %v1338 = vmax.f32 %v1052, 0.0
  %v1339 = vmax.f32 %v1057, 0.0
  %v1340 = vmax.f32 %v1062, 0.0
  %v1341 = vmax.f32 %v1067, 0.0
  %v1342 = vmax.f32 %v1072, 0.0
  %v1343 = vmax.f32 %v1077, 0.0
  %v1344 = vmax.f32 %v1082, 0.0
  %v1345 = vmax.f32 %v1087, 0.0
  %v1346 = vmax.f32 %v1092, 0.0
  %v1347 = vmax.f32 %v1097, 0.0
  %v1348 = vmax.f32 %v1102, 0.0
  %v1349 = vmax.f32 %v1107, 0.0
  %v1350 = vmax.f32 %v1112, 0.0
  %v1351 = vmax.f32 %v1117, 0.0
  %v1352 = vmax.f32 %v1122, 0.0
  %v1353 = vmax.f32 %v1127, 0.0
  %v1354 = vmax.f32 %v1132, 0.0
  %v1355 = vmax.f32 %v1137, 0.0
  %v1356 = vmax.f32 %v1142, 0.0
  %v1357 = vmax.f32 %v1147, 0.0
  %v1358 = vmax.f32 %v1152, 0.0
  %v1359 = vmax.f32 %v1157, 0.0
  %v1360 = vmax.f32 %v1162, 0.0
  %v1361 = vmax.f32 %v1167, 0.0
  %v1362 = vmax.f32 %v1172, 0.0
  %v1363 = vmax.f32 %v1177, 0.0
  %v1364 = vmax.f32 %v1182, 0.0
  %v1365 = vmax.f32 %v1187, 0.0
  %v1366 = vmax.f32 %v1192, 0.0
  %v1367 = vmax.f32 %v1197, 0.0
  %v1368 = vmax.f32 %v1202, 0.0
  %v1369 = vmax.f32 %v1207, 0.0
  %v1370 = vmax.f32 %v1212, 0.0
  %v1371 = vmax.f32 %v1217, 0.0
  %v1372 = vmax.f32 %v1222, 0.0
  %v1373 = vmax.f32 %v1227, 0.0
  %v1374 = vmax.f32 %v1232, 0.0
  %v1375 = vmax.f32 %v1237, 0.0
  %v1376 = vmax.f32 %v1242, 0.0
  %v1377 = vmax.f32 %v1247, 0.0
  %v1378 = vmax.f32 %v1252, 0.0
  %v1379 = vmax.f32 %v1257, 0.0
  %v1380 = vmax.f32 %v1262, 0.0
  %v1381 = vmax.f32 %v1267, 0.0
  %v1382 = vmax.f32 %v1272, 0.0
  %v1383 = vmax.f32 %v1277, 0.0
  %v1384 = vmax.f32 %v1282, 0.0
  %v1385 = vmax.f32 %v1287, 0.0
  %v1386 = vmax.f32 %v1292, 0.0
  %v1387 = vmax.f32 %v1297, 0.0
  %v1388 = vmax.f32 %v1302, 0.0
  %v1389 = vmax.f32 %v1307, 0.0
  %v1390 = vmax.f32 %v1312, 0.0
  %v1391 = vmax.f32 %v1317, 0.0
  %v1392 = vmax.f32 %v1322, 0.0
  %v1393 = vmax.f32 %v1327, 0.0
  %v1394 = vld [vmem:[%s5] sm:$0xff]
  %v1395 = vld [vmem:[%s6] sm:$0x1]
  %v1397 = vlaneseq
  %v1398 = vshrl.u32 %v1397, 7
  %v1399 = vsub.s32 0, %v1398
  %v1400 = vrot.slane %v1395, %v1399
  %v1403 = vsel %vm752, %v1330, 0
  %v1406 = vsel %vm752, %v1331, 0
  %v1409 = vsel %vm752, %v1332, 0
  %v1412 = vsel %vm752, %v1333, 0
  %v1415 = vsel %vm752, %v1334, 0
  %v1418 = vsel %vm752, %v1335, 0
  %v1421 = vsel %vm752, %v1336, 0
  %v1424 = vsel %vm752, %v1337, 0
  %v1427 = vsel %vm752, %v1338, 0
  %v1430 = vsel %vm752, %v1339, 0
  %v1433 = vsel %vm752, %v1340, 0
  %v1436 = vsel %vm752, %v1341, 0
  %v1439 = vsel %vm752, %v1342, 0
  %v1442 = vsel %vm752, %v1343, 0
  %v1445 = vsel %vm752, %v1344, 0
  %v1448 = vsel %vm752, %v1345, 0
  %v1451 = vsel %vm752, %v1346, 0
  %v1454 = vsel %vm752, %v1347, 0
  %v1457 = vsel %vm752, %v1348, 0
  %v1460 = vsel %vm752, %v1349, 0
  %v1463 = vsel %vm752, %v1350, 0
  %v1466 = vsel %vm752, %v1351, 0
  %v1469 = vsel %vm752, %v1352, 0
  %v1472 = vsel %vm752, %v1353, 0
  %v1475 = vsel %vm752, %v1354, 0
  %v1478 = vsel %vm752, %v1355, 0
  %v1481 = vsel %vm752, %v1356, 0
  %v1484 = vsel %vm752, %v1357, 0
  %v1487 = vsel %vm752, %v1358, 0
  %v1490 = vsel %vm752, %v1359, 0
  %v1493 = vsel %vm752, %v1360, 0
  %v1496 = vsel %vm752, %v1361, 0
  %v1499 = vsel %vm752, %v1362, 0
  %v1502 = vsel %vm752, %v1363, 0
  %v1505 = vsel %vm752, %v1364, 0
  %v1508 = vsel %vm752, %v1365, 0
  %v1511 = vsel %vm752, %v1366, 0
  %v1514 = vsel %vm752, %v1367, 0
  %v1517 = vsel %vm752, %v1368, 0
  %v1520 = vsel %vm752, %v1369, 0
  %v1523 = vsel %vm752, %v1370, 0
  %v1526 = vsel %vm752, %v1371, 0
  %v1529 = vsel %vm752, %v1372, 0
  %v1532 = vsel %vm752, %v1373, 0
  %v1535 = vsel %vm752, %v1374, 0
  %v1538 = vsel %vm752, %v1375, 0
  %v1541 = vsel %vm752, %v1376, 0
  %v1544 = vsel %vm752, %v1377, 0
  %v1547 = vsel %vm752, %v1378, 0
  %v1550 = vsel %vm752, %v1379, 0
  %v1553 = vsel %vm752, %v1380, 0
  %v1556 = vsel %vm752, %v1381, 0
  %v1559 = vsel %vm752, %v1382, 0
  %v1562 = vsel %vm752, %v1383, 0
  %v1565 = vsel %vm752, %v1384, 0
  %v1568 = vsel %vm752, %v1385, 0
  %v1571 = vsel %vm752, %v1386, 0
  %v1574 = vsel %vm752, %v1387, 0
  %v1577 = vsel %vm752, %v1388, 0
  %v1580 = vsel %vm752, %v1389, 0
  %v1583 = vsel %vm752, %v1390, 0
  %v1586 = vsel %vm752, %v1391, 0
  %v1589 = vsel %vm752, %v1392, 0
  %v1592 = vsel %vm752, %v1393, 0
  %1594 = vmatprep.subr.mxu0 0.0
  %1595 = vmatpush1.msra.mxu0 0.0
  %1596 = vmatprep.subr.mxu0 0.0
  %1597 = vmatpush1.msra.mxu0 0.0
  %1598 = vmatprep.subr.mxu0 0.0
  %1599 = vmatpush1.msra.mxu0 0.0
  %1600 = vmatprep.subr.mxu0 0.0
  %1601 = vmatpush1.msra.mxu0 0.0
  %1602 = vmatprep.subr.mxu0 0.0
  %1603 = vmatpush1.msra.mxu0 0.0
  %1604 = vmatprep.subr.mxu0 0.0
  %1605 = vmatpush1.msra.mxu0 0.0
  %1606 = vmatprep.subr.mxu0 0.0
  %1607 = vmatpush1.msra.mxu0 0.0
  %1608 = vmatprep.subr.mxu0 0.0
  %1609 = vmatpush1.msra.mxu0 0.0
  %1610 = vmatprep.subr.mxu0 0.0
  %1611 = vmatpush1.msra.mxu0 0.0
  %1612 = vmatprep.subr.mxu0 0.0
  %1613 = vmatpush1.msra.mxu0 0.0
  %1614 = vmatprep.subr.mxu0 0.0
  %1615 = vmatpush1.msra.mxu0 0.0
  %1616 = vmatprep.subr.mxu0 0.0
  %1617 = vmatpush1.msra.mxu0 0.0
  %1618 = vmatprep.subr.mxu0 0.0
  %1619 = vmatpush1.msra.mxu0 0.0
  %1620 = vmatprep.subr.mxu0 0.0
  %1621 = vmatpush1.msra.mxu0 0.0
  %1622 = vmatprep.subr.mxu0 0.0
  %1623 = vmatpush1.msra.mxu0 0.0
  %1624 = vmatprep.subr.mxu0 0.0
  %1625 = vmatpush1.msra.mxu0 %v1394
  %1626 = vmatprep.subr.mxu0 0.0
  %1627 = vmatpush2.msra.mxu0 0.0
  %1628 = vmatprep.subr.mxu0 0.0
  %1629 = vmatpush2.msra.mxu0 0.0
  %1630 = vmatprep.subr.mxu0 0.0
  %1631 = vmatpush2.msra.mxu0 0.0
  %1632 = vmatprep.subr.mxu0 0.0
  %1633 = vmatpush2.msra.mxu0 0.0
  %1634 = vmatprep.subr.mxu0 0.0
  %1635 = vmatpush2.msra.mxu0 0.0
  %1636 = vmatprep.subr.mxu0 0.0
  %1637 = vmatpush2.msra.mxu0 0.0
  %1638 = vmatprep.subr.mxu0 0.0
  %1639 = vmatpush2.msra.mxu0 0.0
  %1640 = vmatprep.subr.mxu0 0.0
  %1641 = vmatpush2.msra.mxu0 0.0
  %1642 = vmatprep.subr.mxu0 0.0
  %1643 = vmatpush2.msra.mxu0 0.0
  %1644 = vmatprep.subr.mxu0 0.0
  %1645 = vmatpush2.msra.mxu0 0.0
  %1646 = vmatprep.subr.mxu0 0.0
  %1647 = vmatpush2.msra.mxu0 0.0
  %1648 = vmatprep.subr.mxu0 0.0
  %1649 = vmatpush2.msra.mxu0 0.0
  %1650 = vmatprep.subr.mxu0 0.0
  %1651 = vmatpush2.msra.mxu0 0.0
  %1652 = vmatprep.subr.mxu0 0.0
  %1653 = vmatpush2.msra.mxu0 0.0
  %1654 = vmatprep.subr.mxu0 0.0
  %1655 = vmatpush2.msra.mxu0 0.0
  %1656 = vmatprep.subr.mxu0 0.0
  %1657 = vmatpush2.msra.mxu0 0.0
  %1658 = vmatprep.mubr.f32.mxu0 0.0
  %1659 = vmatmul.mubr.f32.gmra.mxu0 %v1403
  %v1660 = vpop.f32.mrf.mxu0
  %v1661 = vadd.f32 %v1400, %v1660
  %v1662 = vpop.f32.mrf.mxu0
  %1663 = vmatprep.mubr.f32.mxu0 0.0
  %1664 = vmatmul.mubr.f32.gmra.mxu0 %v1406
  %v1665 = vpop.f32.mrf.mxu0
  %v1666 = vadd.f32 %v1400, %v1665
  %v1667 = vpop.f32.mrf.mxu0
  %1668 = vmatprep.mubr.f32.mxu0 0.0
  %1669 = vmatmul.mubr.f32.gmra.mxu0 %v1409
  %v1670 = vpop.f32.mrf.mxu0
  %v1671 = vadd.f32 %v1400, %v1670
  %v1672 = vpop.f32.mrf.mxu0
  %1673 = vmatprep.mubr.f32.mxu0 0.0
  %1674 = vmatmul.mubr.f32.gmra.mxu0 %v1412
  %v1675 = vpop.f32.mrf.mxu0
  %v1676 = vadd.f32 %v1400, %v1675
  %v1677 = vpop.f32.mrf.mxu0
  %1678 = vmatprep.mubr.f32.mxu0 0.0
  %1679 = vmatmul.mubr.f32.gmra.mxu0 %v1415
  %v1680 = vpop.f32.mrf.mxu0
  %v1681 = vadd.f32 %v1400, %v1680
  %v1682 = vpop.f32.mrf.mxu0
  %1683 = vmatprep.mubr.f32.mxu0 0.0
  %1684 = vmatmul.mubr.f32.gmra.mxu0 %v1418
  %v1685 = vpop.f32.mrf.mxu0
  %v1686 = vadd.f32 %v1400, %v1685
  %v1687 = vpop.f32.mrf.mxu0
  %1688 = vmatprep.mubr.f32.mxu0 0.0
  %1689 = vmatmul.mubr.f32.gmra.mxu0 %v1421
  %v1690 = vpop.f32.mrf.mxu0
  %v1691 = vadd.f32 %v1400, %v1690
  %v1692 = vpop.f32.mrf.mxu0
  %1693 = vmatprep.mubr.f32.mxu0 0.0
  %1694 = vmatmul.mubr.f32.gmra.mxu0 %v1424
  %v1695 = vpop.f32.mrf.mxu0
  %v1696 = vadd.f32 %v1400, %v1695
  %v1697 = vpop.f32.mrf.mxu0
  %1698 = vmatprep.mubr.f32.mxu0 0.0
  %1699 = vmatmul.mubr.f32.gmra.mxu0 %v1427
  %v1700 = vpop.f32.mrf.mxu0
  %v1701 = vadd.f32 %v1400, %v1700
  %v1702 = vpop.f32.mrf.mxu0
  %1703 = vmatprep.mubr.f32.mxu0 0.0
  %1704 = vmatmul.mubr.f32.gmra.mxu0 %v1430
  %v1705 = vpop.f32.mrf.mxu0
  %v1706 = vadd.f32 %v1400, %v1705
  %v1707 = vpop.f32.mrf.mxu0
  %1708 = vmatprep.mubr.f32.mxu0 0.0
  %1709 = vmatmul.mubr.f32.gmra.mxu0 %v1433
  %v1710 = vpop.f32.mrf.mxu0
  %v1711 = vadd.f32 %v1400, %v1710
  %v1712 = vpop.f32.mrf.mxu0
  %1713 = vmatprep.mubr.f32.mxu0 0.0
  %1714 = vmatmul.mubr.f32.gmra.mxu0 %v1436
  %v1715 = vpop.f32.mrf.mxu0
  %v1716 = vadd.f32 %v1400, %v1715
  %v1717 = vpop.f32.mrf.mxu0
  %1718 = vmatprep.mubr.f32.mxu0 0.0
  %1719 = vmatmul.mubr.f32.gmra.mxu0 %v1439
  %v1720 = vpop.f32.mrf.mxu0
  %v1721 = vadd.f32 %v1400, %v1720
  %v1722 = vpop.f32.mrf.mxu0
  %1723 = vmatprep.mubr.f32.mxu0 0.0
  %1724 = vmatmul.mubr.f32.gmra.mxu0 %v1442
  %v1725 = vpop.f32.mrf.mxu0
  %v1726 = vadd.f32 %v1400, %v1725
  %v1727 = vpop.f32.mrf.mxu0
  %1728 = vmatprep.mubr.f32.mxu0 0.0
  %1729 = vmatmul.mubr.f32.gmra.mxu0 %v1445
  %v1730 = vpop.f32.mrf.mxu0
  %v1731 = vadd.f32 %v1400, %v1730
  %v1732 = vpop.f32.mrf.mxu0
  %1733 = vmatprep.mubr.f32.mxu0 0.0
  %1734 = vmatmul.mubr.f32.gmra.mxu0 %v1448
  %v1735 = vpop.f32.mrf.mxu0
  %v1736 = vadd.f32 %v1400, %v1735
  %v1737 = vpop.f32.mrf.mxu0
  %1738 = vmatprep.mubr.f32.mxu0 0.0
  %1739 = vmatmul.mubr.f32.gmra.mxu0 %v1451
  %v1740 = vpop.f32.mrf.mxu0
  %v1741 = vadd.f32 %v1400, %v1740
  %v1742 = vpop.f32.mrf.mxu0
  %1743 = vmatprep.mubr.f32.mxu0 0.0
  %1744 = vmatmul.mubr.f32.gmra.mxu0 %v1454
  %v1745 = vpop.f32.mrf.mxu0
  %v1746 = vadd.f32 %v1400, %v1745
  %v1747 = vpop.f32.mrf.mxu0
  %1748 = vmatprep.mubr.f32.mxu0 0.0
  %1749 = vmatmul.mubr.f32.gmra.mxu0 %v1457
  %v1750 = vpop.f32.mrf.mxu0
  %v1751 = vadd.f32 %v1400, %v1750
  %v1752 = vpop.f32.mrf.mxu0
  %1753 = vmatprep.mubr.f32.mxu0 0.0
  %1754 = vmatmul.mubr.f32.gmra.mxu0 %v1460
  %v1755 = vpop.f32.mrf.mxu0
  %v1756 = vadd.f32 %v1400, %v1755
  %v1757 = vpop.f32.mrf.mxu0
  %1758 = vmatprep.mubr.f32.mxu0 0.0
  %1759 = vmatmul.mubr.f32.gmra.mxu0 %v1463
  %v1760 = vpop.f32.mrf.mxu0
  %v1761 = vadd.f32 %v1400, %v1760
  %v1762 = vpop.f32.mrf.mxu0
  %1763 = vmatprep.mubr.f32.mxu0 0.0
  %1764 = vmatmul.mubr.f32.gmra.mxu0 %v1466
  %v1765 = vpop.f32.mrf.mxu0
  %v1766 = vadd.f32 %v1400, %v1765
  %v1767 = vpop.f32.mrf.mxu0
  %1768 = vmatprep.mubr.f32.mxu0 0.0
  %1769 = vmatmul.mubr.f32.gmra.mxu0 %v1469
  %v1770 = vpop.f32.mrf.mxu0
  %v1771 = vadd.f32 %v1400, %v1770
  %v1772 = vpop.f32.mrf.mxu0
  %1773 = vmatprep.mubr.f32.mxu0 0.0
  %1774 = vmatmul.mubr.f32.gmra.mxu0 %v1472
  %v1775 = vpop.f32.mrf.mxu0
  %v1776 = vadd.f32 %v1400, %v1775
  %v1777 = vpop.f32.mrf.mxu0
  %1778 = vmatprep.mubr.f32.mxu0 0.0
  %1779 = vmatmul.mubr.f32.gmra.mxu0 %v1475
  %v1780 = vpop.f32.mrf.mxu0
  %v1781 = vadd.f32 %v1400, %v1780
  %v1782 = vpop.f32.mrf.mxu0
  %1783 = vmatprep.mubr.f32.mxu0 0.0
  %1784 = vmatmul.mubr.f32.gmra.mxu0 %v1478
  %v1785 = vpop.f32.mrf.mxu0
  %v1786 = vadd.f32 %v1400, %v1785
  %v1787 = vpop.f32.mrf.mxu0
  %1788 = vmatprep.mubr.f32.mxu0 0.0
  %1789 = vmatmul.mubr.f32.gmra.mxu0 %v1481
  %v1790 = vpop.f32.mrf.mxu0
  %v1791 = vadd.f32 %v1400, %v1790
  %v1792 = vpop.f32.mrf.mxu0
  %1793 = vmatprep.mubr.f32.mxu0 0.0
  %1794 = vmatmul.mubr.f32.gmra.mxu0 %v1484
  %v1795 = vpop.f32.mrf.mxu0
  %v1796 = vadd.f32 %v1400, %v1795
  %v1797 = vpop.f32.mrf.mxu0
  %1798 = vmatprep.mubr.f32.mxu0 0.0
  %1799 = vmatmul.mubr.f32.gmra.mxu0 %v1487
  %v1800 = vpop.f32.mrf.mxu0
  %v1801 = vadd.f32 %v1400, %v1800
  %v1802 = vpop.f32.mrf.mxu0
  %1803 = vmatprep.mubr.f32.mxu0 0.0
  %1804 = vmatmul.mubr.f32.gmra.mxu0 %v1490
  %v1805 = vpop.f32.mrf.mxu0
  %v1806 = vadd.f32 %v1400, %v1805
  %v1807 = vpop.f32.mrf.mxu0
  %1808 = vmatprep.mubr.f32.mxu0 0.0
  %1809 = vmatmul.mubr.f32.gmra.mxu0 %v1493
  %v1810 = vpop.f32.mrf.mxu0
  %v1811 = vadd.f32 %v1400, %v1810
  %v1812 = vpop.f32.mrf.mxu0
  %1813 = vmatprep.mubr.f32.mxu0 0.0
  %1814 = vmatmul.mubr.f32.gmra.mxu0 %v1496
  %v1815 = vpop.f32.mrf.mxu0
  %v1816 = vadd.f32 %v1400, %v1815
  %v1817 = vpop.f32.mrf.mxu0
  %1818 = vmatprep.mubr.f32.mxu0 0.0
  %1819 = vmatmul.mubr.f32.gmra.mxu0 %v1499
  %v1820 = vpop.f32.mrf.mxu0
  %v1821 = vadd.f32 %v1400, %v1820
  %v1822 = vpop.f32.mrf.mxu0
  %1823 = vmatprep.mubr.f32.mxu0 0.0
  %1824 = vmatmul.mubr.f32.gmra.mxu0 %v1502
  %v1825 = vpop.f32.mrf.mxu0
  %v1826 = vadd.f32 %v1400, %v1825
  %v1827 = vpop.f32.mrf.mxu0
  %1828 = vmatprep.mubr.f32.mxu0 0.0
  %1829 = vmatmul.mubr.f32.gmra.mxu0 %v1505
  %v1830 = vpop.f32.mrf.mxu0
  %v1831 = vadd.f32 %v1400, %v1830
  %v1832 = vpop.f32.mrf.mxu0
  %1833 = vmatprep.mubr.f32.mxu0 0.0
  %1834 = vmatmul.mubr.f32.gmra.mxu0 %v1508
  %v1835 = vpop.f32.mrf.mxu0
  %v1836 = vadd.f32 %v1400, %v1835
  %v1837 = vpop.f32.mrf.mxu0
  %1838 = vmatprep.mubr.f32.mxu0 0.0
  %1839 = vmatmul.mubr.f32.gmra.mxu0 %v1511
  %v1840 = vpop.f32.mrf.mxu0
  %v1841 = vadd.f32 %v1400, %v1840
  %v1842 = vpop.f32.mrf.mxu0
  %1843 = vmatprep.mubr.f32.mxu0 0.0
  %1844 = vmatmul.mubr.f32.gmra.mxu0 %v1514
  %v1845 = vpop.f32.mrf.mxu0
  %v1846 = vadd.f32 %v1400, %v1845
  %v1847 = vpop.f32.mrf.mxu0
  %1848 = vmatprep.mubr.f32.mxu0 0.0
  %1849 = vmatmul.mubr.f32.gmra.mxu0 %v1517
  %v1850 = vpop.f32.mrf.mxu0
  %v1851 = vadd.f32 %v1400, %v1850
  %v1852 = vpop.f32.mrf.mxu0
  %1853 = vmatprep.mubr.f32.mxu0 0.0
  %1854 = vmatmul.mubr.f32.gmra.mxu0 %v1520
  %v1855 = vpop.f32.mrf.mxu0
  %v1856 = vadd.f32 %v1400, %v1855
  %v1857 = vpop.f32.mrf.mxu0
  %1858 = vmatprep.mubr.f32.mxu0 0.0
  %1859 = vmatmul.mubr.f32.gmra.mxu0 %v1523
  %v1860 = vpop.f32.mrf.mxu0
  %v1861 = vadd.f32 %v1400, %v1860
  %v1862 = vpop.f32.mrf.mxu0
  %1863 = vmatprep.mubr.f32.mxu0 0.0
  %1864 = vmatmul.mubr.f32.gmra.mxu0 %v1526
  %v1865 = vpop.f32.mrf.mxu0
  %v1866 = vadd.f32 %v1400, %v1865
  %v1867 = vpop.f32.mrf.mxu0
  %1868 = vmatprep.mubr.f32.mxu0 0.0
  %1869 = vmatmul.mubr.f32.gmra.mxu0 %v1529
  %v1870 = vpop.f32.mrf.mxu0
  %v1871 = vadd.f32 %v1400, %v1870
  %v1872 = vpop.f32.mrf.mxu0
  %1873 = vmatprep.mubr.f32.mxu0 0.0
  %1874 = vmatmul.mubr.f32.gmra.mxu0 %v1532
  %v1875 = vpop.f32.mrf.mxu0
  %v1876 = vadd.f32 %v1400, %v1875
  %v1877 = vpop.f32.mrf.mxu0
  %1878 = vmatprep.mubr.f32.mxu0 0.0
  %1879 = vmatmul.mubr.f32.gmra.mxu0 %v1535
  %v1880 = vpop.f32.mrf.mxu0
  %v1881 = vadd.f32 %v1400, %v1880
  %v1882 = vpop.f32.mrf.mxu0
  %1883 = vmatprep.mubr.f32.mxu0 0.0
  %1884 = vmatmul.mubr.f32.gmra.mxu0 %v1538
  %v1885 = vpop.f32.mrf.mxu0
  %v1886 = vadd.f32 %v1400, %v1885
  %v1887 = vpop.f32.mrf.mxu0
  %1888 = vmatprep.mubr.f32.mxu0 0.0
  %1889 = vmatmul.mubr.f32.gmra.mxu0 %v1541
  %v1890 = vpop.f32.mrf.mxu0
  %v1891 = vadd.f32 %v1400, %v1890
  %v1892 = vpop.f32.mrf.mxu0
  %1893 = vmatprep.mubr.f32.mxu0 0.0
  %1894 = vmatmul.mubr.f32.gmra.mxu0 %v1544
  %v1895 = vpop.f32.mrf.mxu0
  %v1896 = vadd.f32 %v1400, %v1895
  %v1897 = vpop.f32.mrf.mxu0
  %1898 = vmatprep.mubr.f32.mxu0 0.0
  %1899 = vmatmul.mubr.f32.gmra.mxu0 %v1547
  %v1900 = vpop.f32.mrf.mxu0
  %v1901 = vadd.f32 %v1400, %v1900
  %v1902 = vpop.f32.mrf.mxu0
  %1903 = vmatprep.mubr.f32.mxu0 0.0
  %1904 = vmatmul.mubr.f32.gmra.mxu0 %v1550
  %v1905 = vpop.f32.mrf.mxu0
  %v1906 = vadd.f32 %v1400, %v1905
  %v1907 = vpop.f32.mrf.mxu0
  %1908 = vmatprep.mubr.f32.mxu0 0.0
  %1909 = vmatmul.mubr.f32.gmra.mxu0 %v1553
  %v1910 = vpop.f32.mrf.mxu0
  %v1911 = vadd.f32 %v1400, %v1910
  %v1912 = vpop.f32.mrf.mxu0
  %1913 = vmatprep.mubr.f32.mxu0 0.0
  %1914 = vmatmul.mubr.f32.gmra.mxu0 %v1556
  %v1915 = vpop.f32.mrf.mxu0
  %v1916 = vadd.f32 %v1400, %v1915
  %v1917 = vpop.f32.mrf.mxu0
  %1918 = vmatprep.mubr.f32.mxu0 0.0
  %1919 = vmatmul.mubr.f32.gmra.mxu0 %v1559
  %v1920 = vpop.f32.mrf.mxu0
  %v1921 = vadd.f32 %v1400, %v1920
  %v1922 = vpop.f32.mrf.mxu0
  %1923 = vmatprep.mubr.f32.mxu0 0.0
  %1924 = vmatmul.mubr.f32.gmra.mxu0 %v1562
  %v1925 = vpop.f32.mrf.mxu0
  %v1926 = vadd.f32 %v1400, %v1925
  %v1927 = vpop.f32.mrf.mxu0
  %1928 = vmatprep.mubr.f32.mxu0 0.0
  %1929 = vmatmul.mubr.f32.gmra.mxu0 %v1565
  %v1930 = vpop.f32.mrf.mxu0
  %v1931 = vadd.f32 %v1400, %v1930
  %v1932 = vpop.f32.mrf.mxu0
  %1933 = vmatprep.mubr.f32.mxu0 0.0
  %1934 = vmatmul.mubr.f32.gmra.mxu0 %v1568
  %v1935 = vpop.f32.mrf.mxu0
  %v1936 = vadd.f32 %v1400, %v1935
  %v1937 = vpop.f32.mrf.mxu0
  %1938 = vmatprep.mubr.f32.mxu0 0.0
  %1939 = vmatmul.mubr.f32.gmra.mxu0 %v1571
  %v1940 = vpop.f32.mrf.mxu0
  %v1941 = vadd.f32 %v1400, %v1940
  %v1942 = vpop.f32.mrf.mxu0
  %1943 = vmatprep.mubr.f32.mxu0 0.0
  %1944 = vmatmul.mubr.f32.gmra.mxu0 %v1574
  %v1945 = vpop.f32.mrf.mxu0
  %v1946 = vadd.f32 %v1400, %v1945
  %v1947 = vpop.f32.mrf.mxu0
  %1948 = vmatprep.mubr.f32.mxu0 0.0
  %1949 = vmatmul.mubr.f32.gmra.mxu0 %v1577
  %v1950 = vpop.f32.mrf.mxu0
  %v1951 = vadd.f32 %v1400, %v1950
  %v1952 = vpop.f32.mrf.mxu0
  %1953 = vmatprep.mubr.f32.mxu0 0.0
  %1954 = vmatmul.mubr.f32.gmra.mxu0 %v1580
  %v1955 = vpop.f32.mrf.mxu0
  %v1956 = vadd.f32 %v1400, %v1955
  %v1957 = vpop.f32.mrf.mxu0
  %1958 = vmatprep.mubr.f32.mxu0 0.0
  %1959 = vmatmul.mubr.f32.gmra.mxu0 %v1583
  %v1960 = vpop.f32.mrf.mxu0
  %v1961 = vadd.f32 %v1400, %v1960
  %v1962 = vpop.f32.mrf.mxu0
  %1963 = vmatprep.mubr.f32.mxu0 0.0
  %1964 = vmatmul.mubr.f32.gmra.mxu0 %v1586
  %v1965 = vpop.f32.mrf.mxu0
  %v1966 = vadd.f32 %v1400, %v1965
  %v1967 = vpop.f32.mrf.mxu0
  %1968 = vmatprep.mubr.f32.mxu0 0.0
  %1969 = vmatmul.mubr.f32.gmra.mxu0 %v1589
  %v1970 = vpop.f32.mrf.mxu0
  %v1971 = vadd.f32 %v1400, %v1970
  %v1972 = vpop.f32.mrf.mxu0
  %1973 = vmatprep.mubr.f32.mxu0 0.0
  %1974 = vmatmul.mubr.f32.gmra.mxu0 %v1592
  %v1975 = vpop.f32.mrf.mxu0
  %v1976 = vadd.f32 %v1400, %v1975
  %v1977 = vpop.f32.mrf.mxu0
  %1978 = vdwg.mxu0
  %vm1979 = vcmask 23552
  %1980 = vst.msk [vmem:[%s7] sm:$0xff] %vm1979, %v1661
  %1981 = vst.msk [vmem:[%s7 + $0x8] sm:$0xff] %vm1979, %v1666
  %1982 = vst.msk [vmem:[%s7 + $0x10] sm:$0xff] %vm1979, %v1671
  %1983 = vst.msk [vmem:[%s7 + $0x18] sm:$0xff] %vm1979, %v1676
  %1984 = vst.msk [vmem:[%s7 + $0x20] sm:$0xff] %vm1979, %v1681
  %1985 = vst.msk [vmem:[%s7 + $0x28] sm:$0xff] %vm1979, %v1686
  %1986 = vst.msk [vmem:[%s7 + $0x30] sm:$0xff] %vm1979, %v1691
  %1987 = vst.msk [vmem:[%s7 + $0x38] sm:$0xff] %vm1979, %v1696
  %1988 = vst.msk [vmem:[%s7 + $0x40] sm:$0xff] %vm1979, %v1701
  %1989 = vst.msk [vmem:[%s7 + $0x48] sm:$0xff] %vm1979, %v1706
  %1990 = vst.msk [vmem:[%s7 + $0x50] sm:$0xff] %vm1979, %v1711
  %1991 = vst.msk [vmem:[%s7 + $0x58] sm:$0xff] %vm1979, %v1716
  %1992 = vst.msk [vmem:[%s7 + $0x60] sm:$0xff] %vm1979, %v1721
  %1993 = vst.msk [vmem:[%s7 + $0x68] sm:$0xff] %vm1979, %v1726
  %1994 = vst.msk [vmem:[%s7 + $0x70] sm:$0xff] %vm1979, %v1731
  %1995 = vst.msk [vmem:[%s7 + $0x78] sm:$0xff] %vm1979, %v1736
  %1996 = vst.msk [vmem:[%s7 + $0x80] sm:$0xff] %vm1979, %v1741
  %1997 = vst.msk [vmem:[%s7 + $0x88] sm:$0xff] %vm1979, %v1746
  %1998 = vst.msk [vmem:[%s7 + $0x90] sm:$0xff] %vm1979, %v1751
  %1999 = vst.msk [vmem:[%s7 + $0x98] sm:$0xff] %vm1979, %v1756
  %2000 = vst.msk [vmem:[%s7 + $0xa0] sm:$0xff] %vm1979, %v1761
  %2001 = vst.msk [vmem:[%s7 + $0xa8] sm:$0xff] %vm1979, %v1766
  %2002 = vst.msk [vmem:[%s7 + $0xb0] sm:$0xff] %vm1979, %v1771
  %2003 = vst.msk [vmem:[%s7 + $0xb8] sm:$0xff] %vm1979, %v1776
  %2004 = vst.msk [vmem:[%s7 + $0xc0] sm:$0xff] %vm1979, %v1781
  %2005 = vst.msk [vmem:[%s7 + $0xc8] sm:$0xff] %vm1979, %v1786
  %2006 = vst.msk [vmem:[%s7 + $0xd0] sm:$0xff] %vm1979, %v1791
  %2007 = vst.msk [vmem:[%s7 + $0xd8] sm:$0xff] %vm1979, %v1796
  %2008 = vst.msk [vmem:[%s7 + $0xe0] sm:$0xff] %vm1979, %v1801
  %2009 = vst.msk [vmem:[%s7 + $0xe8] sm:$0xff] %vm1979, %v1806
  %2010 = vst.msk [vmem:[%s7 + $0xf0] sm:$0xff] %vm1979, %v1811
  %2011 = vst.msk [vmem:[%s7 + $0xf8] sm:$0xff] %vm1979, %v1816
  %2012 = vst.msk [vmem:[%s7 + $0x100] sm:$0xff] %vm1979, %v1821
  %2013 = vst.msk [vmem:[%s7 + $0x108] sm:$0xff] %vm1979, %v1826
  %2014 = vst.msk [vmem:[%s7 + $0x110] sm:$0xff] %vm1979, %v1831
  %2015 = vst.msk [vmem:[%s7 + $0x118] sm:$0xff] %vm1979, %v1836
  %2016 = vst.msk [vmem:[%s7 + $0x120] sm:$0xff] %vm1979, %v1841
  %2017 = vst.msk [vmem:[%s7 + $0x128] sm:$0xff] %vm1979, %v1846
  %2018 = vst.msk [vmem:[%s7 + $0x130] sm:$0xff] %vm1979, %v1851
  %2019 = vst.msk [vmem:[%s7 + $0x138] sm:$0xff] %vm1979, %v1856
  %2020 = vst.msk [vmem:[%s7 + $0x140] sm:$0xff] %vm1979, %v1861
  %2021 = vst.msk [vmem:[%s7 + $0x148] sm:$0xff] %vm1979, %v1866
  %2022 = vst.msk [vmem:[%s7 + $0x150] sm:$0xff] %vm1979, %v1871
  %2023 = vst.msk [vmem:[%s7 + $0x158] sm:$0xff] %vm1979, %v1876
  %2024 = vst.msk [vmem:[%s7 + $0x160] sm:$0xff] %vm1979, %v1881
  %2025 = vst.msk [vmem:[%s7 + $0x168] sm:$0xff] %vm1979, %v1886
  %2026 = vst.msk [vmem:[%s7 + $0x170] sm:$0xff] %vm1979, %v1891
  %2027 = vst.msk [vmem:[%s7 + $0x178] sm:$0xff] %vm1979, %v1896
  %2028 = vst.msk [vmem:[%s7 + $0x180] sm:$0xff] %vm1979, %v1901
  %2029 = vst.msk [vmem:[%s7 + $0x188] sm:$0xff] %vm1979, %v1906
  %2030 = vst.msk [vmem:[%s7 + $0x190] sm:$0xff] %vm1979, %v1911
  %2031 = vst.msk [vmem:[%s7 + $0x198] sm:$0xff] %vm1979, %v1916
  %2032 = vst.msk [vmem:[%s7 + $0x1a0] sm:$0xff] %vm1979, %v1921
  %2033 = vst.msk [vmem:[%s7 + $0x1a8] sm:$0xff] %vm1979, %v1926
  %2034 = vst.msk [vmem:[%s7 + $0x1b0] sm:$0xff] %vm1979, %v1931
  %2035 = vst.msk [vmem:[%s7 + $0x1b8] sm:$0xff] %vm1979, %v1936
  %2036 = vst.msk [vmem:[%s7 + $0x1c0] sm:$0xff] %vm1979, %v1941
  %2037 = vst.msk [vmem:[%s7 + $0x1c8] sm:$0xff] %vm1979, %v1946
  %2038 = vst.msk [vmem:[%s7 + $0x1d0] sm:$0xff] %vm1979, %v1951
  %2039 = vst.msk [vmem:[%s7 + $0x1d8] sm:$0xff] %vm1979, %v1956
  %2040 = vst.msk [vmem:[%s7 + $0x1e0] sm:$0xff] %vm1979, %v1961
  %2041 = vst.msk [vmem:[%s7 + $0x1e8] sm:$0xff] %vm1979, %v1966
  %2042 = vst.msk [vmem:[%s7 + $0x1f0] sm:$0xff] %vm1979, %v1971
  %2043 = vst.msk [vmem:[%s7 + $0x1f8] sm:$0xff] %vm1979, %v1976
  // Predicated region
  $region30: #{tpu_custom_call.1} parent=0 // pred_check
    _
  $region31: #{tpu_custom_call.1} parent=0 // pred_check_branch
    %2045 = sbr.rel (0) target = $region33
  $region32: #{tpu_custom_call.1} parent=0 // pred_region
    _
  $region33: #{tpu_custom_call.1} parent=0 // pred_fallthru
    _
  // Predicated region
  $region34: #{tpu_custom_call.1} parent=0 // pred_check
    _
  $region35: #{tpu_custom_call.1} parent=0 // pred_check_branch
    %2047 = sbr.rel (0) target = $region37
  $region36: #{tpu_custom_call.1} parent=0 // pred_region
    _
  $region37: #{tpu_custom_call.1} parent=0 // pred_fallthru
    _

</llo_original>
